<compile_context>
chip_gen: v7x
topology: tpu7x:2x2x1
jax: 0.10.0
libtpu: 0.0.40
codegen_flags: <defaults>
</compile_context>

<pallas_src>
import jax
import jax.numpy as jnp
import numpy as np
from jax.experimental import pallas as pl
from jax.experimental.pallas import tpu as pltpu


# ---------------------------------------------------------------------------
# Kernels
# ---------------------------------------------------------------------------

def _mean_pool_project_kernel(m_ref, x_ref, w_ref, b_ref, o_ref,
                              sum_ref, len_ref):
    """Masked-mean pool (sequence-chunked), then project (pooling commuted).

    Grid: (batch tiles, sequence chunks); axis 1 is the reduction.
    m_ref  : (tb, 1, ts)  attention-mask chunk, bf16, lane-dense
    x_ref  : (tb, ts, D)  hidden-state chunk (incoming dtype; cast in-register)
    w_ref  : (D, E)       projection weight, bf16
    b_ref  : (1, E)       projection bias, f32
    o_ref  : (tb, E)      pooled embeddings, f32
    sum_ref: (tb, D) f32  masked-sum accumulator (scratch)
    len_ref: (tb, 1) f32  token-count accumulator (scratch)
    """
    k = pl.program_id(1)

    @pl.when(k == 0)
    def _():
        sum_ref[...] = jnp.zeros_like(sum_ref)
        len_ref[...] = jnp.zeros_like(len_ref)

    m = m_ref[...]                                   # bf16
    h = x_ref[...].astype(jnp.bfloat16)              # in-register cast only
    # Masked sequence reduction fused onto the MXU: (tb,1,ts) @ (tb,ts,D).
    # (M=1 matvecs; fine while the path is HBM-bound — see review note.)
    sum_ref[...] += jnp.einsum("bts,bsd->btd", m, h,
                               preferred_element_type=jnp.float32)[:, 0, :]
    len_ref[...] += jnp.sum(m.astype(jnp.float32), axis=2)

    @pl.when(k == pl.num_programs(1) - 1)
    def _():
        # Exact divide; clamp only protects wrapper-padding rows (length == 0).
        pooled = sum_ref[...] / jnp.maximum(len_ref[...], 1.0)        # (tb, D)
        # bf16 x bf16 -> f32 accumulate: no f32 copy of the weight.
        emb = jnp.dot(pooled.astype(jnp.bfloat16), w_ref[...],
                      preferred_element_type=jnp.float32) + b_ref[...]
        o_ref[...] = emb.astype(o_ref.dtype)


def _cls_project_kernel(x_ref, w_ref, b_ref, o_ref):
    """Project the (already-sliced) [CLS] rows only.

    x_ref : (tb, D) CLS hidden rows (incoming dtype; cast in-register)
    """
    emb = jnp.dot(x_ref[...].astype(jnp.bfloat16), w_ref[...],
                  preferred_element_type=jnp.float32) + b_ref[...]
    o_ref[...] = emb.astype(o_ref.dtype)


def _project_max_pool_kernel(x_ref, w_ref, b_ref, o_ref, acc_ref):
    """Project one sequence chunk as a single GEMM, max-reduce into f32 acc.

    Grid: (batch tiles, sequence chunks); axis 1 is the reduction, so the live
    intermediate is (tb*ts, E) instead of (tb*S, E).
    NOTE: max pooling intentionally ignores the attention mask, exactly as the
    PyTorch module does (hidden_states.max(dim=1)[0]).
    """
    k = pl.program_id(1)

    @pl.when(k == 0)
    def _():
        acc_ref[...] = jnp.full_like(acc_ref, -jnp.inf)

    tb, ts, d = x_ref.shape
    h2 = x_ref[...].astype(jnp.bfloat16).reshape(tb * ts, d)   # one MXU GEMM
    proj = jnp.dot(h2, w_ref[...], preferred_element_type=jnp.float32)
    proj = proj.reshape(tb, ts, -1)
    acc_ref[...] = jnp.maximum(acc_ref[...], jnp.max(proj, axis=1))

    @pl.when(k == pl.num_programs(1) - 1)
    def _():
        # Bias is sequence-invariant: add once after the max.
        o_ref[...] = (acc_ref[...] + b_ref[...]).astype(o_ref.dtype)


# ---------------------------------------------------------------------------
# Tiling helpers
# ---------------------------------------------------------------------------

def _round_up(x, m):
    return -(-x // m) * m


def _pick_batch_tile(total, requested):
    """Largest tile <= requested that divides `total` and keeps (tb, E) output
    stores sublane-dense (tb % 8 == 0); `total` itself if it already fits.
    Returns None if no such divisor exists (caller pads)."""
    if total <= requested:
        return total
    for t in range(min(requested, total), 7, -1):
        if total % t == 0 and t % 8 == 0:
            return t
    return None


def _pick_seq_chunk(total, requested, align):
    """Largest chunk <= requested that divides `total` and is a multiple of
    `align` (layout constraint of the chunked block dim); falls back to the
    whole sequence (single chunk)."""
    if total <= requested:
        return total
    for t in range(min(requested, total), align - 1, -1):
        if total % t == 0 and t % align == 0:
            return t
    return total


# ---------------------------------------------------------------------------
# Forward wrapper
# ---------------------------------------------------------------------------

def simple_instruction_encoder_forward(hidden_states, attention_mask, w, b, *,
                                       pooling="mean", batch_tile=128,
                                       seq_chunk=128,
                                       vmem_limit_bytes=48 * 1024 * 1024):
    """Pooled instruction embeddings matching SimpleInstructionEncoder.forward.

    hidden_states : (B, S, D) f32/bf16 -- stand-in for BERT last_hidden_state
    attention_mask: (B, S)    0/1
    w, b          : (D, E), (E,)       -- synthetic projection layer
    Returns (B, E) float32.

    Per-generation tuning knobs:
      batch_tile : output-GEMM rows per grid step.  Pick a divisor of B
                   (avoids padding the dominant operand), a multiple of 8, and
                   ideally so the GEMM M dim (batch_tile for mean/cls,
                   batch_tile*seq_chunk for max) is a multiple of 128 (v5e) /
                   256 (v6e, v7x).  Keep B/batch_tile >= 2 so the 'parallel'
                   axis can shard across both v7x TensorCores.
      seq_chunk  : sequence positions per reduction step.  Size so that the
                   double-buffered (batch_tile, seq_chunk, D) input block plus
                   weight and (tb, E)/(tb, D) accumulators fit
                   vmem_limit_bytes; multiples of 128 keep the mean-path mask
                   chunk lane-aligned.
      vmem_limit_bytes : scoped VMEM budget.  Default 48 MiB leaves headroom
                   under v7x's 64 MiB physical per-core VMEM; raise toward
                   ~100 MiB on v5e/v6e to unlock bigger tiles.
    """
    B, S, D = hidden_states.shape
    E = w.shape[1]

    # Small one-time casts.  The big (B,S,D) operand is NOT pre-cast / padded
    # in the wrapper (extra full HBM pass); kernels cast in-register instead.
    w_bf = w.astype(jnp.bfloat16)
    b2 = b.reshape(1, E).astype(jnp.float32)

    def params(dims):
        return pltpu.CompilerParams(dimension_semantics=dims,
                                    vmem_limit_bytes=vmem_limit_bytes)

    if pooling == "cls":
        # Only sequence position 0 is needed: slice BEFORE any cast/pad so the
        # wrapper touches B*D elements, not B*S*D.
        cls_rows = hidden_states[:, 0, :]                       # (B, D)
        tb = _pick_batch_tile(B, batch_tile)
        Bp = B
        if tb is None:                                          # ragged batch: pad the cheap (B, D) slice only
            tb = _round_up(min(batch_tile, B), 8)
            Bp = _round_up(B, tb)
            cls_rows = jnp.pad(cls_rows, ((0, Bp - B), (0, 0)))
        out = pl.pallas_call(
            _cls_project_kernel,
            out_shape=jax.ShapeDtypeStruct((Bp, E), jnp.float32),
            grid_spec=pltpu.PrefetchScalarGridSpec(
                num_scalar_prefetch=0,
                grid=(Bp // tb,),
                in_specs=[
                    pl.BlockSpec((tb, D), lambda i: (i, 0)),
                    pl.BlockSpec((D, E), lambda i: (0, 0)),
                    pl.BlockSpec((1, E), lambda i: (0, 0)),
                ],
                out_specs=pl.BlockSpec((tb, E), lambda i: (i, 0)),
            ),
            compiler_params=params(("parallel",)),
        )(cls_rows, w_bf, b2)
        return out[:B]

    # mean / max: dominant operand tiled over (batch tiles, sequence chunks).
    tb = _pick_batch_tile(B, batch_tile)
    h = hidden_states
    mask = attention_mask
    Bp = B
    if tb is None:
        # TODO(synk): a masked-final-tile variant would avoid this extra HBM
        # pass; only hit when no 8-aligned divisor of B exists.
        tb = _round_up(min(batch_tile, B), 8)
        Bp = _round_up(B, tb)
        h = jnp.pad(h, ((0, Bp - B), (0, 0), (0, 0)))
        mask = jnp.pad(mask, ((0, Bp - B), (0, 0)))
    n_tiles = Bp // tb

    if pooling == "mean":
        # Mask chunk is the LAST dim of its block -> multiple of 128 lanes
        # (or the whole sequence).
        ts = _pick_seq_chunk(S, seq_chunk, 128)
        mask_row = mask.astype(jnp.bfloat16).reshape(Bp, 1, S)  # lane-dense
        out = pl.pallas_call(
            _mean_pool_project_kernel,
            out_shape=jax.ShapeDtypeStruct((Bp, E), jnp.float32),
            grid_spec=pltpu.PrefetchScalarGridSpec(
                num_scalar_prefetch=0,
                grid=(n_tiles, S // ts),
                in_specs=[
                    pl.BlockSpec((tb, 1, ts), lambda i, k: (i, 0, k)),
                    pl.BlockSpec((tb, ts, D), lambda i, k: (i, k, 0)),
                    pl.BlockSpec((D, E), lambda i, k: (0, 0)),
                    pl.BlockSpec((1, E), lambda i, k: (0, 0)),
                ],
                out_specs=pl.BlockSpec((tb, E), lambda i, k: (i, 0)),
                scratch_shapes=[pltpu.VMEM((tb, D), jnp.float32),
                                pltpu.VMEM((tb, 1), jnp.float32)],
            ),
            compiler_params=params(("parallel", "arbitrary")),
        )(mask_row, h, w_bf, b2)
        return out[:B]

    if pooling == "max":
        ts = _pick_seq_chunk(S, seq_chunk, 8)      # sublane dim: multiple of 8
        out = pl.pallas_call(
            _project_max_pool_kernel,
            out_shape=jax.ShapeDtypeStruct((Bp, E), jnp.float32),
            grid_spec=pltpu.PrefetchScalarGridSpec(
                num_scalar_prefetch=0,
                grid=(n_tiles, S // ts),
                in_specs=[
                    pl.BlockSpec((tb, ts, D), lambda i, k: (i, k, 0)),
                    pl.BlockSpec((D, E), lambda i, k: (0, 0)),
                    pl.BlockSpec((1, E), lambda i, k: (0, 0)),
                ],
                out_specs=pl.BlockSpec((tb, E), lambda i, k: (i, 0)),
                scratch_shapes=[pltpu.VMEM((tb, E), jnp.float32)],
            ),
            compiler_params=params(("parallel", "arbitrary")),
        )(h, w_bf, b2)
        return out[:B]

    raise ValueError(f"Unknown pooling strategy: {pooling}")


# ---------------------------------------------------------------------------
# Reference (original module order, f32) and test
# ---------------------------------------------------------------------------

def _reference(hidden_f32, attention_mask, w, b, pooling):
    """Original module order in f32: project every token, then pool."""
    proj = jnp.einsum("bsd,de->bse", hidden_f32.astype(jnp.float32),
                      w.astype(jnp.float32)) + b[None, None, :]
    if pooling == "mean":
        m = attention_mask.astype(jnp.float32)[..., None]
        return (proj * m).sum(axis=1) / m.sum(axis=1)
    if pooling == "max":
        return proj.max(axis=1)
    if pooling == "cls":
        return proj[:, 0]
    raise ValueError(pooling)


if __name__ == "__main__":
    # Small deterministic setup.  B=32, batch_tile=16 -> 2 batch tiles (so both
    # v7x TensorCores get work); S=256, seq_chunk=128 -> 2 sequence chunks,
    # exercising both reduction accumulators.  MXU-friendly D=E=128.
    B, S, D, VOCAB = 32, 256, 128, 100
    E = D
    key = jax.random.PRNGKey(0)
    k_emb, k_w, k_b, k_tok, k_len = jax.random.split(key, 5)

    # Synthetic "BERT" parameters (deterministic init).
    emb_table = jax.random.normal(k_emb, (VOCAB, D), dtype=jnp.float32) * 0.02
    w = jax.random.normal(k_w, (D, E), dtype=jnp.float32) * 0.02
    b = jax.random.normal(k_b, (E,), dtype=jnp.float32) * 0.02

    # Tokenized "instructions": token ids + padding mask (lengths in [1, S]).
    token_ids = jax.random.randint(k_tok, (B, S), 0, VOCAB)
    lengths = jax.random.randint(k_len, (B,), 1, S + 1)
    attention_mask = (jnp.arange(S)[None, :] < lengths[:, None]).astype(jnp.float32)

    # Glue: embedding lookup (gather) in plain JAX, standing in for the trunk.
    hidden_in = emb_table[token_ids]                 # (B, S, D) float32

    for pooling in ("mean", "max", "cls"):
        out = simple_instruction_encoder_forward(
            hidden_in, attention_mask, w, b, pooling=pooling,
            batch_tile=16, seq_chunk=128)
        out = jax.block_until_ready(out)
        ref = _reference(hidden_in, attention_mask, w, b, pooling)
        # bf16 MXU compute vs f32 reference -> bf16-appropriate tolerances.
        np.testing.assert_allclose(np.asarray(out), np.asarray(ref),
                                   rtol=2e-2, atol=2e-3)
        assert out.shape == (B, E)

    print("KERNEL_OK")
</pallas_src>

<mosaic_0001>
module attributes {stable_mosaic.version = 11 : i64} {
  func.func @_mean_pool_project_kernel(%arg0: i32, %arg1: i32, %arg2: memref<16x1x128xbf16, #tpu.memory_space<vmem>>, %arg3: memref<16x128x128xf32, #tpu.memory_space<vmem>>, %arg4: memref<128x128xbf16, #tpu.memory_space<vmem>>, %arg5: memref<1x128xf32, #tpu.memory_space<vmem>>, %arg6: memref<16x128xf32, #tpu.memory_space<vmem>>, %arg7: memref<16x128xf32, #tpu.memory_space<vmem>>, %arg8: memref<16x1xf32, #tpu.memory_space<vmem>>) attributes {dimension_semantics = [#tpu.dimension_semantics<parallel>, #tpu.dimension_semantics<arbitrary>], iteration_bounds = array<i64: 2, 2>, scalar_prefetch = 0 : i64, scratch_operands = 2 : i64, tpu.core_type = #tpu.core_type<tc>, window_params = [{transform_indices = @transform_0, window_bounds = array<i64: 16, 1, 128>}, {transform_indices = @transform_1, window_bounds = array<i64: 16, 128, 128>}, {pipeline_mode = #tpu.pipeline_mode<synchronous>, transform_indices = @transform_2, window_bounds = array<i64: 128, 128>}, {pipeline_mode = #tpu.pipeline_mode<synchronous>, transform_indices = @transform_3, window_bounds = array<i64: 1, 128>}, {transform_indices = @transform_4, window_bounds = array<i64: 16, 128>}]} {
    %c0_i32 = arith.constant 0 : i32
    %0 = arith.cmpi eq, %arg1, %c0_i32 : i32
    %1 = arith.extui %0 : i1 to i32
    %c0_i32_0 = arith.constant 0 : i32
    %2 = arith.cmpi ne, %1, %c0_i32_0 : i32
    scf.if %2 {
      %cst_16 = arith.constant 0.000000e+00 : f32
      %19 = vector.broadcast %cst_16 : f32 to vector<16x128xf32>
      %c0_17 = arith.constant 0 : index
      %c0_18 = arith.constant 0 : index
      %20 = vector.load %arg7[%c0_17, %c0_18] : memref<16x128xf32, #tpu.memory_space<vmem>>, vector<16x128xf32>
      tpu.vector_store %arg7[%c0_17, %c0_18], %19 {strides = array<i32>} : memref<16x128xf32, #tpu.memory_space<vmem>>, vector<16x128xf32>,
      %cst_19 = arith.constant 0.000000e+00 : f32
      %21 = vector.broadcast %cst_19 : f32 to vector<16x1xf32>
      %c0_20 = arith.constant 0 : index
      %c0_21 = arith.constant 0 : index
      %22 = vector.load %arg8[%c0_20, %c0_21] : memref<16x1xf32, #tpu.memory_space<vmem>>, vector<16x1xf32>
      tpu.vector_store %arg8[%c0_20, %c0_21], %21 {strides = array<i32>} : memref<16x1xf32, #tpu.memory_space<vmem>>, vector<16x1xf32>,
    } else {
    }
    %c0 = arith.constant 0 : index
    %c0_1 = arith.constant 0 : index
    %c0_2 = arith.constant 0 : index
    %3 = vector.load %arg2[%c0, %c0_1, %c0_2] : memref<16x1x128xbf16, #tpu.memory_space<vmem>>, vector<16x1x128xbf16>
    %c0_3 = arith.constant 0 : index
    %c0_4 = arith.constant 0 : index
    %c0_5 = arith.constant 0 : index
    %4 = vector.load %arg3[%c0_3, %c0_4, %c0_5] : memref<16x128x128xf32, #tpu.memory_space<vmem>>, vector<16x128x128xf32>
    %5 = arith.truncf %4 : vector<16x128x128xf32> to vector<16x128x128xbf16>
    %c0_6 = arith.constant 0 : index
    %c0_7 = arith.constant 0 : index
    %6 = vector.load %arg7[%c0_6, %c0_7] : memref<16x128xf32, #tpu.memory_space<vmem>>, vector<16x128xf32>
    "tpu.trace_start"() <{level = 10 : i32, message = "bts,bsd->btd"}> : () -> ()
    %cst = arith.constant dense<0.000000e+00> : vector<16x1x128xf32>
    %7 = tpu.matmul %3, %5, %cst {dimension_numbers = #tpu.dot_dimension_numbers<[2], [1], [1], [2], [0, 0, 0, 1, 1, 2], [0], [0]>} : vector<16x1x128xbf16>, vector<16x128x128xbf16>, vector<16x1x128xf32> -> vector<16x1x128xf32>
    "tpu.trace_stop"() : () -> ()
    %8 = vector.shape_cast %7 : vector<16x1x128xf32> to vector<16x128xf32>
    %9 = arith.addf %6, %8 : vector<16x128xf32>
    %c0_8 = arith.constant 0 : index
    %c0_9 = arith.constant 0 : index
    %10 = vector.load %arg7[%c0_8, %c0_9] : memref<16x128xf32, #tpu.memory_space<vmem>>, vector<16x128xf32>
    tpu.vector_store %arg7[%c0_8, %c0_9], %9 {strides = array<i32>} : memref<16x128xf32, #tpu.memory_space<vmem>>, vector<16x128xf32>,
    %c0_10 = arith.constant 0 : index
    %c0_11 = arith.constant 0 : index
    %11 = vector.load %arg8[%c0_10, %c0_11] : memref<16x1xf32, #tpu.memory_space<vmem>>, vector<16x1xf32>
    %12 = arith.extf %3 : vector<16x1x128xbf16> to vector<16x1x128xf32>
    %cst_12 = arith.constant dense<0.000000e+00> : vector<16x1xf32>
    %13 = vector.multi_reduction <add>, %12, %cst_12 [2] : vector<16x1x128xf32> to vector<16x1xf32>
    %14 = arith.addf %11, %13 : vector<16x1xf32>
    %c0_13 = arith.constant 0 : index
    %c0_14 = arith.constant 0 : index
    %15 = vector.load %arg8[%c0_13, %c0_14] : memref<16x1xf32, #tpu.memory_space<vmem>>, vector<16x1xf32>
    tpu.vector_store %arg8[%c0_13, %c0_14], %14 {strides = array<i32>} : memref<16x1xf32, #tpu.memory_space<vmem>>, vector<16x1xf32>,
    %c1_i32 = arith.constant 1 : i32
    %16 = arith.cmpi eq, %arg1, %c1_i32 : i32
    %17 = arith.extui %16 : i1 to i32
    %c0_i32_15 = arith.constant 0 : i32
    %18 = arith.cmpi ne, %17, %c0_i32_15 : i32
    scf.if %18 {
      %c0_16 = arith.constant 0 : index
      %c0_17 = arith.constant 0 : index
      %19 = vector.load %arg7[%c0_16, %c0_17] : memref<16x128xf32, #tpu.memory_space<vmem>>, vector<16x128xf32>
      %c0_18 = arith.constant 0 : index
      %c0_19 = arith.constant 0 : index
      %20 = vector.load %arg8[%c0_18, %c0_19] : memref<16x1xf32, #tpu.memory_space<vmem>>, vector<16x1xf32>
      %cst_20 = arith.constant 1.000000e+00 : f32
      %21 = vector.broadcast %cst_20 : f32 to vector<16x1xf32>
      %22 = arith.maximumf %20, %21 : vector<16x1xf32>
      %23 = vector.broadcast %22 : vector<16x1xf32> to vector<16x128xf32>
      %24 = arith.divf %19, %23 : vector<16x128xf32>
      %25 = arith.truncf %24 : vector<16x128xf32> to vector<16x128xbf16>
      %c0_21 = arith.constant 0 : index
      %c0_22 = arith.constant 0 : index
      %26 = vector.load %arg4[%c0_21, %c0_22] : memref<128x128xbf16, #tpu.memory_space<vmem>>, vector<128x128xbf16>
      %cst_23 = arith.constant dense<0.000000e+00> : vector<16x128xf32>
      %27 = tpu.matmul %25, %26, %cst_23 {dimension_numbers = #tpu.dot_dimension_numbers<[1], [0], [0], [1], [0, 0, 1, 1], [], []>} : vector<16x128xbf16>, vector<128x128xbf16>, vector<16x128xf32> -> vector<16x128xf32>
      %c0_24 = arith.constant 0 : index
      %c0_25 = arith.constant 0 : index
      %28 = vector.load %arg5[%c0_24, %c0_25] : memref<1x128xf32, #tpu.memory_space<vmem>>, vector<1x128xf32>
      %29 = vector.broadcast %28 : vector<1x128xf32> to vector<16x128xf32>
      %30 = arith.addf %27, %29 : vector<16x128xf32>
      %c0_26 = arith.constant 0 : index
      %c0_27 = arith.constant 0 : index
      %31 = vector.load %arg6[%c0_26, %c0_27] : memref<16x128xf32, #tpu.memory_space<vmem>>, vector<16x128xf32>
      tpu.vector_store %arg6[%c0_26, %c0_27], %30 {strides = array<i32>} : memref<16x128xf32, #tpu.memory_space<vmem>>, vector<16x128xf32>,
    } else {
    }
    return
  }
  func.func @transform_0(%arg0: i32, %arg1: i32) -> (i32, i32, i32) {
    %c0_i32 = arith.constant 0 : i32
    %c0_i32_0 = arith.constant 0 : i32
    return %arg0, %c0_i32, %arg1 : i32, i32, i32
  }
  func.func @transform_1(%arg0: i32, %arg1: i32) -> (i32, i32, i32) {
    %c0_i32 = arith.constant 0 : i32
    %c0_i32_0 = arith.constant 0 : i32
    return %arg0, %arg1, %c0_i32 : i32, i32, i32
  }
  func.func @transform_2(%arg0: i32, %arg1: i32) -> (i32, i32) {
    %c0_i32 = arith.constant 0 : i32
    %c0_i32_0 = arith.constant 0 : i32
    %c0_i32_1 = arith.constant 0 : i32
    return %c0_i32, %c0_i32_0 : i32, i32
  }
  func.func @transform_3(%arg0: i32, %arg1: i32) -> (i32, i32) {
    %c0_i32 = arith.constant 0 : i32
    %c0_i32_0 = arith.constant 0 : i32
    %c0_i32_1 = arith.constant 0 : i32
    return %c0_i32, %c0_i32_0 : i32, i32
  }
  func.func @transform_4(%arg0: i32, %arg1: i32) -> (i32, i32) {
    %c0_i32 = arith.constant 0 : i32
    %c0_i32_0 = arith.constant 0 : i32
    return %arg0, %c0_i32 : i32, i32
  }
}

</mosaic_0001>

<llo_original>
// kernel: tpu_custom_call.1
$region0: #{tpu_custom_call.1}
  #allocation0 [shape = 'u32[]', space=smem, size = 0x4, offset = 0x4, fixed_abs, tag = 'smem constant byte address 0x4 - core index']
  #allocation1 [shape = 'u32[144,128]{1,0:T(1,128)}', space=vmem, size = 0x12000, scoped, tag = 'internal scratch']
  #allocation2 [shape = 'f32[16,128]{1,0:T(8,128)}', space=vmem, size = 0x2000, scoped, tag = 'scratch operand']
  #allocation3 [shape = 'f32[16,1]{1,0:T(8,128)}', space=vmem, size = 0x2000, scoped, tag = 'scratch operand']
  #allocation12 [shape = 's32[]', space=sflag, size = 0x4, offset = 0, fixed_abs, tag = 'sflag constant byte address 0x0 - dummy sync flag']
  %s0 = inlined_call_operand.vmem [shape: bf16[32,1,256], index: 0, kind: input, shape index: {}]
  %s1 = inlined_call_operand.hbm [shape: f32[32,256,128], index: 1, kind: input, shape index: {}]
  %s2 = inlined_call_operand.hbm [shape: bf16[128,128], index: 2, kind: input, shape index: {}]
  %s3 = inlined_call_operand.hbm [shape: f32[1,128], index: 3, kind: input, shape index: {}]
  %s4 = inlined_call_operand.hbm [shape: f32[32,128], index: 4, kind: output, shape index: {}]
  %s5 = sld [smem:[#allocation0]]
  $region110: #{tpu_custom_call.1} parent=0
    _
  %s7 = ssub.s32 1, %s5
  %s8 = scalar_select 0, %s7, %s5
  $region1: #{tpu_custom_call.1} parent=0
    #allocation4 [shape = 'u8[16384]{0}', space=vmem, size = 0x4000, scoped, tag = 'input window, operand 0']
    #allocation5 [shape = 'u8[2097152]{0}', space=vmem, size = 0x200000, scoped, tag = 'input window, operand 1']
    #allocation6 [shape = 's32[2]{0}', space=sflag, size = 0x8, scoped, tag = 'scoped memory for tpu_custom_call.1']
    #allocation7 [shape = 's32[2]{0}', space=sflag, size = 0x8, scoped, tag = 'scoped memory for tpu_custom_call.1']
    #allocation8 [shape = 'u8[32768]{0}', space=vmem, size = 0x8000, scoped, tag = 'input window, operand 2, single buffered']
    #allocation9 [shape = 's32[1]{0}', space=sflag, size = 0x4, scoped, tag = 'scoped memory for tpu_custom_call.1']
    #allocation10 [shape = 'u8[512]{0}', space=vmem, size = 0x400, scoped, tag = 'input window, operand 3, single buffered']
    #allocation11 [shape = 'u8[16384]{0}', space=vmem, size = 0x4000, scoped, tag = 'output window, operand 0']
    %9 = vsyncpa [#allocation6], 0
    %s10 = scalar_lea.sflag [#allocation6], 1
    %11 = vsyncpa %s10, 0
    %12 = vsyncpa [#allocation9], 0
    %13 = vsyncpa [#allocation7], 0
    %s14 = scalar_lea.sflag [#allocation7], 1
    %15 = vsyncpa %s14, 0
    loop: start=0, step=1, limit=6
    $region2: #{tpu_custom_call.1} parent=1 // loop_pre_header
      _
    $region3: #{tpu_custom_call.1} parent=1 // loop_header
      %s17 = sphi 0, %s21
      %p18 = scmp.ge.s32.totalorder %s17, 6
      %s24 = sphi 0, %s36
      %s25 = sphi 0, %s32
      %s26 = sphi 0, %s24
      %s27 = sphi 0, %s25
      %s28 = sphi 0, %s26
      %s29 = sphi 0, %s27
      %s41 = sphi 0, %s43
      %s44 = sphi 0, %s41
      %s45 = sphi 0, %s44
      %s61 = sphi 0, %s45
      %s69 = sphi 0, %s71
      %s72 = sphi 0, %s69
      %s73 = sphi 0, %s72
      %s89 = sphi 0, %s73
      %s93 = sphi 0, %s93
      %s95 = sphi 0, %s93
      %s96 = sphi 0, %s95
      %s110 = sphi 0, %s96
      %s114 = sphi 0, %s114
      %s116 = sphi 0, %s114
      %s117 = sphi 0, %s116
      %s131 = sphi 0, %s117
      %s137 = sphi 0, %s139
      %s140 = sphi 0, %s137
      %s141 = sphi 0, %s140
      %s157 = sphi 0, %s141
    $region4: #{tpu_custom_call.1} parent=1 // loop_header_branch
      %20 = sbr.rel (%p18) target = $region8
    $region5: #{tpu_custom_call.1} parent=1 // loop_body
      %s22 = ssub.s32 %s17, 1
      %s23 = ssub.s32 %s17, 2
      %s30 = sadd.s32 1, %s25
      %p31 = scmp.ge.s32.totalorder %s30, 2
      %s32 = scalar_select %p31, 0, %s30
      %s33 = sadd.s32 1, %s24
      %s34 = scalar_select %p31, %s33, %s24
      %p35 = scmp.ge.s32.totalorder %s34, 2
      %s36 = scalar_select %p35, 0, %s34
      %s37 = ssub.s32 %s24, %s36
      %s38 = ssub.s32 %s25, %s32
      %s39 = sor.u32 %s37, %s38
      %p40 = scmp.eq.s32.totalorder %s39, 0
      %s42 = sadd.s32 %s41, 1
      %s43 = scalar_select %p40, %s41, %s42
      %p46 = pneg %p40
      %p47 = scmp.eq.s32.totalorder %s17, 3
      %p48 = por %p46, %p47
      %p49 = scmp.ne.s32.totalorder %s41, %s44
      %p50 = scmp.eq.s32.totalorder %s17, 0
      %p51 = por %p49, %p50
      %p52 = scmp.ne.s32.totalorder %s41, %s44
      %p53 = scmp.eq.s32.totalorder %s22, 3
      %p54 = por %p52, %p53
      %p55 = scmp.ne.s32.totalorder %s44, %s45
      %p56 = scmp.eq.s32.totalorder %s22, 0
      %p57 = por %p55, %p56
      %p58 = scmp.ne.s32.totalorder %s44, %s45
      %p59 = scmp.eq.s32.totalorder %s23, 3
      %p60 = por %p58, %p59
      %p62 = scmp.ne.s32.totalorder %s45, %s61
      %p63 = scmp.eq.s32.totalorder %s23, 0
      %p64 = por %p62, %p63
      %s65 = ssub.s32 %s24, %s36
      %s66 = ssub.s32 %s25, %s32
      %s67 = sor.u32 %s65, %s66
      %p68 = scmp.eq.s32.totalorder %s67, 0
      %s70 = sadd.s32 %s69, 1
      %s71 = scalar_select %p68, %s69, %s70
      %p74 = pneg %p68
      %p75 = scmp.eq.s32.totalorder %s17, 3
      %p76 = por %p74, %p75
      %p77 = scmp.ne.s32.totalorder %s69, %s72
      %p78 = scmp.eq.s32.totalorder %s17, 0
      %p79 = por %p77, %p78
      %p80 = scmp.ne.s32.totalorder %s69, %s72
      %p81 = scmp.eq.s32.totalorder %s22, 3
      %p82 = por %p80, %p81
      %p83 = scmp.ne.s32.totalorder %s72, %s73
      %p84 = scmp.eq.s32.totalorder %s22, 0
      %p85 = por %p83, %p84
      %p86 = scmp.ne.s32.totalorder %s72, %s73
      %p87 = scmp.eq.s32.totalorder %s23, 3
      %p88 = por %p86, %p87
      %p90 = scmp.ne.s32.totalorder %s73, %s89
      %p91 = scmp.eq.s32.totalorder %s23, 0
      %p92 = por %p90, %p91
      %s94 = sadd.s32 %s93, 1
      %p97 = scmp.eq.s32.totalorder %s17, 3
      %p98 = scmp.ne.s32.totalorder %s93, %s95
      %p99 = scmp.eq.s32.totalorder %s17, 0
      %p100 = por %p98, %p99
      %p101 = scmp.ne.s32.totalorder %s93, %s95
      %p102 = scmp.eq.s32.totalorder %s22, 3
      %p103 = por %p101, %p102
      %p104 = scmp.ne.s32.totalorder %s95, %s96
      %p105 = scmp.eq.s32.totalorder %s22, 0
      %p106 = por %p104, %p105
      %p107 = scmp.ne.s32.totalorder %s95, %s96
      %p108 = scmp.eq.s32.totalorder %s23, 3
      %p109 = por %p107, %p108
      %p111 = scmp.ne.s32.totalorder %s96, %s110
      %p112 = scmp.eq.s32.totalorder %s23, 0
      %p113 = por %p111, %p112
      %s115 = sadd.s32 %s114, 1
      %p118 = scmp.eq.s32.totalorder %s17, 3
      %p119 = scmp.ne.s32.totalorder %s114, %s116
      %p120 = scmp.eq.s32.totalorder %s17, 0
      %p121 = por %p119, %p120
      %p122 = scmp.ne.s32.totalorder %s114, %s116
      %p123 = scmp.eq.s32.totalorder %s22, 3
      %p124 = por %p122, %p123
      %p125 = scmp.ne.s32.totalorder %s116, %s117
      %p126 = scmp.eq.s32.totalorder %s22, 0
      %p127 = por %p125, %p126
      %p128 = scmp.ne.s32.totalorder %s116, %s117
      %p129 = scmp.eq.s32.totalorder %s23, 3
      %p130 = por %p128, %p129
      %p132 = scmp.ne.s32.totalorder %s117, %s131
      %p133 = scmp.eq.s32.totalorder %s23, 0
      %p134 = por %p132, %p133
      %s135 = ssub.s32 %s24, %s36
      %p136 = scmp.eq.s32.totalorder %s135, 0
      %s138 = sadd.s32 %s137, 1
      %s139 = scalar_select %p136, %s137, %s138
      %p142 = pneg %p136
      %p143 = scmp.eq.s32.totalorder %s17, 3
      %p144 = por %p142, %p143
      %p145 = scmp.ne.s32.totalorder %s137, %s140
      %p146 = scmp.eq.s32.totalorder %s17, 0
      %p147 = por %p145, %p146
      %p148 = scmp.ne.s32.totalorder %s137, %s140
      %p149 = scmp.eq.s32.totalorder %s22, 3
      %p150 = por %p148, %p149
      %p151 = scmp.ne.s32.totalorder %s140, %s141
      %p152 = scmp.eq.s32.totalorder %s22, 0
      %p153 = por %p151, %p152
      %p154 = scmp.ne.s32.totalorder %s140, %s141
      %p155 = scmp.eq.s32.totalorder %s23, 3
      %p156 = por %p154, %p155
      %p158 = scmp.ne.s32.totalorder %s141, %s157
      %p159 = scmp.eq.s32.totalorder %s23, 0
      %p160 = por %p158, %p159
      %p161 = scmp.le.s32.totalorder 1, %s17
      %p162 = scmp.lt.s32.totalorder %s17, 5
      %p163 = pnand %p161, %p162
      %p164 = pneg %p163
      // Predicated region
      $region9: #{tpu_custom_call.1} parent=5 // pred_check
        _
      $region10: #{tpu_custom_call.1} parent=5 // pred_check_branch
        %166 = sbr.rel (%p163) target = $region12
      $region11: #{tpu_custom_call.1} parent=5 // pred_region
        %s167 = ssub.s32 %s17, 1
        // Predicated region
        $region13: #{tpu_custom_call.1} parent=11 // pred_check
          %p168 = pneg %p106
        $region14: #{tpu_custom_call.1} parent=11 // pred_check_branch
          %170 = sbr.rel (%p168) target = $region16
        $region15: #{tpu_custom_call.1} parent=11 // pred_region
          %s172 = ssub.s32 1024, 1024
          %173 = vsyncadd [#allocation9], %s172
          %s174 = sshll.u32 [#allocation8], 4
          %s175 = int_to_ptr.vmem [resolvable:$true] %s174
          %180 = dma.hbm_to_vmem [thread:$0]  %s2, 1024, %s175, [#allocation9], 64, 64, 4
        $region16: #{tpu_custom_call.1} parent=11 // pred_fallthru
          _
        // Predicated region
        $region17: #{tpu_custom_call.1} parent=11 // pred_check
          %p181 = pneg %p127
        $region18: #{tpu_custom_call.1} parent=11 // pred_check_branch
          %183 = sbr.rel (%p181) target = $region20
        $region19: #{tpu_custom_call.1} parent=11 // pred_region
          %s185 = ssub.s32 16, 16
          %186 = vsyncadd [#allocation9], %s185
          %s188 = sshll.u32 [#allocation10], 4
          %s189 = int_to_ptr.vmem [resolvable:$true] %s188
          %191 = dma.hbm_to_vmem [thread:$0]  %s3, 16, %s189, [#allocation9]
        $region20: #{tpu_custom_call.1} parent=11 // pred_fallthru
          _
      $region12: #{tpu_custom_call.1} parent=5 // pred_fallthru
        _
      %p192 = scmp.lt.s32.totalorder %s17, 4
      // Predicated region
      $region21: #{tpu_custom_call.1} parent=5 // pred_check
        %p193 = pneg %p192
      $region22: #{tpu_custom_call.1} parent=5 // pred_check_branch
        %195 = sbr.rel (%p193) target = $region24
      $region23: #{tpu_custom_call.1} parent=5 // pred_region
        // Predicated region
        $region25: #{tpu_custom_call.1} parent=23 // pred_check
          %p196 = pneg %p51
        $region26: #{tpu_custom_call.1} parent=23 // pred_check_branch
          %198 = sbr.rel (%p196) target = $region28
        $region27: #{tpu_custom_call.1} parent=23 // pred_region
          %s199 = sand.u32 %s41, 1
          %s200 = sand.u32 %s41, 1
          %s201 = smul.addr %s200, 16
          %s202 = scalar_lea.vmem [#allocation4], %s201
          %s203 = smul.u32 16, %s24
          %s204 = smul.addr %s203, 2
          %s205 = sadd.s32 %s25, %s204
          %s206 = scalar_lea.vmem %s0, %s205
          // Predicated region
          $region29: #{tpu_custom_call.1} parent=27 // pred_check
            _
          $region30: #{tpu_custom_call.1} parent=27 // pred_check_branch
            %208 = sbr.rel (0) target = $region32
          $region31: #{tpu_custom_call.1} parent=27 // pred_region
            // Predicated region
            $region33: #{tpu_custom_call.1} parent=31 // pred_check
              _
            $region34: #{tpu_custom_call.1} parent=31 // pred_check_branch
              %210 = sbr.rel target = $region36
            $region35: #{tpu_custom_call.1} parent=31 // pred_region
              // Predicated region
              $region48: #{tpu_custom_call.1} parent=35 // pred_check
                _
              $region49: #{tpu_custom_call.1} parent=35 // pred_check_branch
                %255 = sbr.rel (0) target = $region51
              $region50: #{tpu_custom_call.1} parent=35 // pred_region
                loop: start=0, step=1, limit=1
                $region52: #{tpu_custom_call.1} parent=50 // loop_pre_header
                  _
                $region53: #{tpu_custom_call.1} parent=50 // loop_header
                  %s257 = sphi 0, %s261
                  %p258 = scmp.ge.s32.totalorder %s257, 1
                  %s262 = sphi %s206, %s206
                  %s263 = sphi %s202, %s202
                $region54: #{tpu_custom_call.1} parent=50 // loop_header_branch
                  %260 = sbr.rel (%p258) target = $region58
                $region55: #{tpu_custom_call.1} parent=50 // loop_body
                  _
                $region56: #{tpu_custom_call.1} parent=50 // loop_footer
                  %s261 = sadd.s32 1, %s257
                $region57: #{tpu_custom_call.1} parent=50 // loop_footer_branch
                  %256 = sbr.rel target = $region53
                $region58: #{tpu_custom_call.1} parent=50 // loop_exit
                  _
                loop: start=0, step=1, limit=1
                $region59: #{tpu_custom_call.1} parent=50 // loop_pre_header
                  _
                $region60: #{tpu_custom_call.1} parent=50 // loop_header
                  %s266 = sphi 0, %s270
                  %p267 = scmp.ge.s32.totalorder %s266, 1
                  %s271 = sphi %s206, %s206
                  %s272 = sphi %s202, %s202
                $region61: #{tpu_custom_call.1} parent=50 // loop_header_branch
                  %269 = sbr.rel (%p267) target = $region65
                $region62: #{tpu_custom_call.1} parent=50 // loop_body
                  %v273 = vld [vmem:[%s271] sm:$0x1]
                  %274 = vst [vmem:[%s272] sm:$0x1] %v273
                  %v275 = vld [vmem:[%s271 + $0x2] sm:$0x1]
                  %276 = vst [vmem:[%s272 + $0x1] sm:$0x1] %v275
                  %v277 = vld [vmem:[%s271 + $0x4] sm:$0x1]
                  %278 = vst [vmem:[%s272 + $0x2] sm:$0x1] %v277
                  %v279 = vld [vmem:[%s271 + $0x6] sm:$0x1]
                  %280 = vst [vmem:[%s272 + $0x3] sm:$0x1] %v279
                  %v281 = vld [vmem:[%s271 + $0x8] sm:$0x1]
                  %282 = vst [vmem:[%s272 + $0x4] sm:$0x1] %v281
                  %v283 = vld [vmem:[%s271 + $0xa] sm:$0x1]
                  %284 = vst [vmem:[%s272 + $0x5] sm:$0x1] %v283
                  %v285 = vld [vmem:[%s271 + $0xc] sm:$0x1]
                  %286 = vst [vmem:[%s272 + $0x6] sm:$0x1] %v285
                  %v287 = vld [vmem:[%s271 + $0xe] sm:$0x1]
                  %288 = vst [vmem:[%s272 + $0x7] sm:$0x1] %v287
                  %v289 = vld [vmem:[%s271 + $0x10] sm:$0x1]
                  %290 = vst [vmem:[%s272 + $0x8] sm:$0x1] %v289
                  %v291 = vld [vmem:[%s271 + $0x12] sm:$0x1]
                  %292 = vst [vmem:[%s272 + $0x9] sm:$0x1] %v291
                  %v293 = vld [vmem:[%s271 + $0x14] sm:$0x1]
                  %294 = vst [vmem:[%s272 + $0xa] sm:$0x1] %v293
                  %v295 = vld [vmem:[%s271 + $0x16] sm:$0x1]
                  %296 = vst [vmem:[%s272 + $0xb] sm:$0x1] %v295
                  %v297 = vld [vmem:[%s271 + $0x18] sm:$0x1]
                  %298 = vst [vmem:[%s272 + $0xc] sm:$0x1] %v297
                  %v299 = vld [vmem:[%s271 + $0x1a] sm:$0x1]
                  %300 = vst [vmem:[%s272 + $0xd] sm:$0x1] %v299
                  %v301 = vld [vmem:[%s271 + $0x1c] sm:$0x1]
                  %302 = vst [vmem:[%s272 + $0xe] sm:$0x1] %v301
                  %v303 = vld [vmem:[%s271 + $0x1e] sm:$0x1]
                  %304 = vst [vmem:[%s272 + $0xf] sm:$0x1] %v303
                $region63: #{tpu_custom_call.1} parent=50 // loop_footer
                  %s270 = sadd.s32 1, %s266
                $region64: #{tpu_custom_call.1} parent=50 // loop_footer_branch
                  %265 = sbr.rel target = $region60
                $region65: #{tpu_custom_call.1} parent=50 // loop_exit
                  _
              $region51: #{tpu_custom_call.1} parent=35 // pred_fallthru
                _
            $region36: #{tpu_custom_call.1} parent=31 // pred_fallthru
              _
            // Predicated region
            $region37: #{tpu_custom_call.1} parent=31 // pred_check
              _
            $region38: #{tpu_custom_call.1} parent=31 // pred_check_branch
              %212 = sbr.rel (0) target = $region40
            $region39: #{tpu_custom_call.1} parent=31 // pred_region
              loop: start=0, step=1, limit=1
              $region41: #{tpu_custom_call.1} parent=39 // loop_pre_header
                _
              $region42: #{tpu_custom_call.1} parent=39 // loop_header
                %s215 = sphi 0, %s219
                %p216 = scmp.ge.s32.totalorder %s215, 1
                %s220 = sphi %s206, %s206
                %s221 = sphi %s202, %s202
              $region43: #{tpu_custom_call.1} parent=39 // loop_header_branch
                %218 = sbr.rel (%p216) target = $region47
              $region44: #{tpu_custom_call.1} parent=39 // loop_body
                %v222 = vld [vmem:[%s220] sm:$0x1]
                %223 = vst [vmem:[%s221] sm:$0x1] %v222
                %v224 = vld [vmem:[%s220 + $0x2] sm:$0x1]
                %225 = vst [vmem:[%s221 + $0x1] sm:$0x1] %v224
                %v226 = vld [vmem:[%s220 + $0x4] sm:$0x1]
                %227 = vst [vmem:[%s221 + $0x2] sm:$0x1] %v226
                %v228 = vld [vmem:[%s220 + $0x6] sm:$0x1]
                %229 = vst [vmem:[%s221 + $0x3] sm:$0x1] %v228
                %v230 = vld [vmem:[%s220 + $0x8] sm:$0x1]
                %231 = vst [vmem:[%s221 + $0x4] sm:$0x1] %v230
                %v232 = vld [vmem:[%s220 + $0xa] sm:$0x1]
                %233 = vst [vmem:[%s221 + $0x5] sm:$0x1] %v232
                %v234 = vld [vmem:[%s220 + $0xc] sm:$0x1]
                %235 = vst [vmem:[%s221 + $0x6] sm:$0x1] %v234
                %v236 = vld [vmem:[%s220 + $0xe] sm:$0x1]
                %237 = vst [vmem:[%s221 + $0x7] sm:$0x1] %v236
                %v238 = vld [vmem:[%s220 + $0x10] sm:$0x1]
                %239 = vst [vmem:[%s221 + $0x8] sm:$0x1] %v238
                %v240 = vld [vmem:[%s220 + $0x12] sm:$0x1]
                %241 = vst [vmem:[%s221 + $0x9] sm:$0x1] %v240
                %v242 = vld [vmem:[%s220 + $0x14] sm:$0x1]
                %243 = vst [vmem:[%s221 + $0xa] sm:$0x1] %v242
                %v244 = vld [vmem:[%s220 + $0x16] sm:$0x1]
                %245 = vst [vmem:[%s221 + $0xb] sm:$0x1] %v244
                %v246 = vld [vmem:[%s220 + $0x18] sm:$0x1]
                %247 = vst [vmem:[%s221 + $0xc] sm:$0x1] %v246
                %v248 = vld [vmem:[%s220 + $0x1a] sm:$0x1]
                %249 = vst [vmem:[%s221 + $0xd] sm:$0x1] %v248
                %v250 = vld [vmem:[%s220 + $0x1c] sm:$0x1]
                %251 = vst [vmem:[%s221 + $0xe] sm:$0x1] %v250
                %v252 = vld [vmem:[%s220 + $0x1e] sm:$0x1]
                %253 = vst [vmem:[%s221 + $0xf] sm:$0x1] %v252
              $region45: #{tpu_custom_call.1} parent=39 // loop_footer
                %s219 = sadd.s32 1, %s215
              $region46: #{tpu_custom_call.1} parent=39 // loop_footer_branch
                %214 = sbr.rel target = $region42
              $region47: #{tpu_custom_call.1} parent=39 // loop_exit
                _
            $region40: #{tpu_custom_call.1} parent=31 // pred_fallthru
              _
          $region32: #{tpu_custom_call.1} parent=27 // pred_fallthru
            _
          %305 = vnop
        $region28: #{tpu_custom_call.1} parent=23 // pred_fallthru
          _
        // Predicated region
        $region66: #{tpu_custom_call.1} parent=23 // pred_check
          %p306 = pneg %p79
        $region67: #{tpu_custom_call.1} parent=23 // pred_check_branch
          %308 = sbr.rel (%p306) target = $region69
        $region68: #{tpu_custom_call.1} parent=23 // pred_region
          #allocation13 [shape = 'u32[6]{0}', space=smem, size = 0x18, scoped, tag = 'DMA stride descriptor']
          %s309 = sand.u32 %s69, 1
          %s310 = scalar_lea.sflag [#allocation6], %s309
          %s311 = sand.u32 %s69, 1
          %s312 = smul.addr %s311, 2048
          %s313 = scalar_lea.vmem [#allocation5], %s312
          %s314 = smul.u32 16, %s24
          %s315 = smul.u32 16, %s25
          %s317 = ssub.s32 32768, 32768
          %318 = vsyncadd %s310, %s317
          %s319 = smul.addr %s314, 32
          %s320 = sadd.s32 %s315, %s319
          %s321 = smul.addr %s320, 128
          %s322 = scalar_lea.hbm %s1, %s321
          %s324 = sshll.u32 1, 14
          %s325 = sxor.u32 4294967295, %s324
          %s327 = sld [smem:[#allocation0]]
          %s328 = sadd.s32 2, %s327
          %s330 = sshll.u32 7, 26
          %s331 = sxor.u32 4294967295, %s330
          %s332 = sand.u32 0, %s331
          %s333 = sshll.u32 %s328, 26
          %s334 = sor.u32 %s332, %s333
          %s335 = sshll.u32 %s313, 4
          %s336 = int_to_ptr.vmem [resolvable:$true] %s335
          %342 = sst [smem:[#allocation13]] 4096
          %s343 = scalar_lea.smem [#allocation13], 1
          %344 = sst [smem:[%s343]] 2048
          %s345 = scalar_lea.smem [#allocation13], 2
          %346 = sst [smem:[%s345]] 16
          %s347 = scalar_lea.smem [#allocation13], 3
          %348 = sst [smem:[%s347]] 128
          %s349 = scalar_lea.smem [#allocation13], 4
          %350 = sst [smem:[%s349]] 128
          %s351 = scalar_lea.smem [#allocation13], 5
          %352 = sst [smem:[%s351]] 8
          %354 = dma.general %s322, 32768, %s336, %s310, [#allocation12], [#allocation13], %s334, 0
        $region69: #{tpu_custom_call.1} parent=23 // pred_fallthru
          _
      $region24: #{tpu_custom_call.1} parent=5 // pred_fallthru
        _
      %p355 = scmp.le.s32.totalorder 1, %s17
      %p356 = scmp.lt.s32.totalorder %s17, 5
      %p357 = pnand %p355, %p356
      %p358 = pneg %p357
      // Predicated region
      $region70: #{tpu_custom_call.1} parent=5 // pred_check
        _
      $region71: #{tpu_custom_call.1} parent=5 // pred_check_branch
        %360 = sbr.rel (%p357) target = $region73
      $region72: #{tpu_custom_call.1} parent=5 // pred_region
        %s361 = ssub.s32 %s17, 1
        %s362 = sand.u32 %s44, 1
        %s363 = sand.u32 %s44, 1
        %s364 = smul.addr %s363, 16
        %s365 = scalar_lea.vmem [#allocation4], %s364
        // Predicated region
        $region74: #{tpu_custom_call.1} parent=72 // pred_check
          %p366 = pneg %p57
        $region75: #{tpu_custom_call.1} parent=72 // pred_check_branch
          %368 = sbr.rel (%p366) target = $region77
        $region76: #{tpu_custom_call.1} parent=72 // pred_region
          _
        $region77: #{tpu_custom_call.1} parent=72 // pred_fallthru
          _
        %s369 = sand.u32 %s72, 1
        %s370 = scalar_lea.sflag [#allocation6], %s369
        %s371 = sand.u32 %s72, 1
        %s372 = smul.addr %s371, 2048
        %s373 = scalar_lea.vmem [#allocation5], %s372
        // Predicated region
        $region78: #{tpu_custom_call.1} parent=72 // pred_check
          %p374 = pneg %p85
        $region79: #{tpu_custom_call.1} parent=72 // pred_check_branch
          %376 = sbr.rel (%p374) target = $region81
        $region80: #{tpu_custom_call.1} parent=72 // pred_region
          %377 = dma.done %s370, 32768
        $region81: #{tpu_custom_call.1} parent=72 // pred_fallthru
          _
        // Predicated region
        $region82: #{tpu_custom_call.1} parent=72 // pred_check
          %p378 = pneg %p106
        $region83: #{tpu_custom_call.1} parent=72 // pred_check_branch
          %380 = sbr.rel (%p378) target = $region85
        $region84: #{tpu_custom_call.1} parent=72 // pred_region
          %381 = dma.done [#allocation9], 1024
        $region85: #{tpu_custom_call.1} parent=72 // pred_fallthru
          _
        // Predicated region
        $region86: #{tpu_custom_call.1} parent=72 // pred_check
          %p382 = pneg %p127
        $region87: #{tpu_custom_call.1} parent=72 // pred_check_branch
          %384 = sbr.rel (%p382) target = $region89
        $region88: #{tpu_custom_call.1} parent=72 // pred_region
          %385 = dma.done [#allocation9], 16
        $region89: #{tpu_custom_call.1} parent=72 // pred_fallthru
          _
        %s386 = sand.u32 %s44, 1
        %s387 = sand.u32 %s44, 1
        %s388 = smul.addr %s387, 16
        %s389 = scalar_lea.vmem [#allocation4], %s388
        %p390 = pneg %p57
        %p391 = pneg %p54
        %s392 = sand.u32 %s72, 1
        %s393 = scalar_lea.sflag [#allocation6], %s392
        %s394 = sand.u32 %s72, 1
        %s395 = smul.addr %s394, 2048
        %s396 = scalar_lea.vmem [#allocation5], %s395
        %p397 = pneg %p85
        %p398 = pneg %p82
        %p399 = pneg %p106
        %p400 = pneg %p103
        %p401 = pneg %p127
        %p402 = pneg %p124
        %p403 = pneg %p153
        %p404 = pneg %p150
        %s405 = sand.u32 %s140, 1
        %s406 = scalar_lea.sflag [#allocation7], %s405
        %s407 = sand.u32 %s140, 1
        %s408 = smul.addr %s407, 16
        %s409 = scalar_lea.vmem [#allocation11], %s408
        %s410 = smul.u32 16, %s26
        %s411 = smul.u32 16, %s26
        %s412 = smul.u32 16, %s27
        %s413 = smul.u32 2, %s26
        %p415 = scmp.eq.s32.totalorder %s27, 0
        // Predicated region
        $region90: #{tpu_custom_call.1} parent=72 // pred_check
          %p416 = pneg %p415
        $region91: #{tpu_custom_call.1} parent=72 // pred_check_branch
          %418 = sbr.rel (%p416) target = $region93
        $region92: #{tpu_custom_call.1} parent=72 // pred_region
          %419 = vst [vmem:[#allocation2] sm:$0xff] 0.0
          %420 = vst [vmem:[#allocation2 + $0x8] sm:$0xff] 0.0
          %vm421 = vcmask 7168
          %422 = vst.msk [vmem:[#allocation3] sm:$0xff] %vm421, 0.0
          %423 = vst.msk [vmem:[#allocation3 + $0x8] sm:$0xff] %vm421, 0.0
        $region93: #{tpu_custom_call.1} parent=72 // pred_fallthru
          _
        %v424 = vld [vmem:[%s365] sm:$0x1]
        %v425 = vld [vmem:[%s365 + $0x1] sm:$0x1]
        %v426 = vld [vmem:[%s365 + $0x2] sm:$0x1]
        %v427 = vld [vmem:[%s365 + $0x3] sm:$0x1]
        %v428 = vld [vmem:[%s365 + $0x4] sm:$0x1]
        %v429 = vld [vmem:[%s365 + $0x5] sm:$0x1]
        %v430 = vld [vmem:[%s365 + $0x6] sm:$0x1]
        %v431 = vld [vmem:[%s365 + $0x7] sm:$0x1]
        %v432 = vld [vmem:[%s365 + $0x8] sm:$0x1]
        %v433 = vld [vmem:[%s365 + $0x9] sm:$0x1]
        %v434 = vld [vmem:[%s365 + $0xa] sm:$0x1]
        %v435 = vld [vmem:[%s365 + $0xb] sm:$0x1]
        %v436 = vld [vmem:[%s365 + $0xc] sm:$0x1]
        %v437 = vld [vmem:[%s365 + $0xd] sm:$0x1]
        %v438 = vld [vmem:[%s365 + $0xe] sm:$0x1]
        %v439 = vld [vmem:[%s365 + $0xf] sm:$0x1]
        %v440 = vld [vmem:[%s373] sm:$0xff]
        %v441 = vld [vmem:[%s373 + $0x8] sm:$0xff]
        %v442 = vld [vmem:[%s373 + $0x10] sm:$0xff]
        %v443 = vld [vmem:[%s373 + $0x18] sm:$0xff]
        %v444 = vld [vmem:[%s373 + $0x20] sm:$0xff]
        %v445 = vld [vmem:[%s373 + $0x28] sm:$0xff]
        %v446 = vld [vmem:[%s373 + $0x30] sm:$0xff]
        %v447 = vld [vmem:[%s373 + $0x38] sm:$0xff]
        %v448 = vld [vmem:[%s373 + $0x40] sm:$0xff]
        %v449 = vld [vmem:[%s373 + $0x48] sm:$0xff]
        %v450 = vld [vmem:[%s373 + $0x50] sm:$0xff]
        %v451 = vld [vmem:[%s373 + $0x58] sm:$0xff]
        %v452 = vld [vmem:[%s373 + $0x60] sm:$0xff]
        %v453 = vld [vmem:[%s373 + $0x68] sm:$0xff]
        %v454 = vld [vmem:[%s373 + $0x70] sm:$0xff]
        %v455 = vld [vmem:[%s373 + $0x78] sm:$0xff]
        %v456 = vld [vmem:[%s373 + $0x80] sm:$0xff]
        %v457 = vld [vmem:[%s373 + $0x88] sm:$0xff]
        %v458 = vld [vmem:[%s373 + $0x90] sm:$0xff]
        %v459 = vld [vmem:[%s373 + $0x98] sm:$0xff]
        %v460 = vld [vmem:[%s373 + $0xa0] sm:$0xff]
        %v461 = vld [vmem:[%s373 + $0xa8] sm:$0xff]
        %v462 = vld [vmem:[%s373 + $0xb0] sm:$0xff]
        %v463 = vld [vmem:[%s373 + $0xb8] sm:$0xff]
        %v464 = vld [vmem:[%s373 + $0xc0] sm:$0xff]
        %v465 = vld [vmem:[%s373 + $0xc8] sm:$0xff]
        %v466 = vld [vmem:[%s373 + $0xd0] sm:$0xff]
        %v467 = vld [vmem:[%s373 + $0xd8] sm:$0xff]
        %v468 = vld [vmem:[%s373 + $0xe0] sm:$0xff]
        %v469 = vld [vmem:[%s373 + $0xe8] sm:$0xff]
        %v470 = vld [vmem:[%s373 + $0xf0] sm:$0xff]
        %v471 = vld [vmem:[%s373 + $0xf8] sm:$0xff]
        %v472 = vld [vmem:[%s373 + $0x100] sm:$0xff]
        %v473 = vld [vmem:[%s373 + $0x108] sm:$0xff]
        %v474 = vld [vmem:[%s373 + $0x110] sm:$0xff]
        %v475 = vld [vmem:[%s373 + $0x118] sm:$0xff]
        %v476 = vld [vmem:[%s373 + $0x120] sm:$0xff]
        %v477 = vld [vmem:[%s373 + $0x128] sm:$0xff]
        %v478 = vld [vmem:[%s373 + $0x130] sm:$0xff]
        %v479 = vld [vmem:[%s373 + $0x138] sm:$0xff]
        %v480 = vld [vmem:[%s373 + $0x140] sm:$0xff]
        %v481 = vld [vmem:[%s373 + $0x148] sm:$0xff]
        %v482 = vld [vmem:[%s373 + $0x150] sm:$0xff]
        %v483 = vld [vmem:[%s373 + $0x158] sm:$0xff]
        %v484 = vld [vmem:[%s373 + $0x160] sm:$0xff]
        %v485 = vld [vmem:[%s373 + $0x168] sm:$0xff]
        %v486 = vld [vmem:[%s373 + $0x170] sm:$0xff]
        %v487 = vld [vmem:[%s373 + $0x178] sm:$0xff]
        %v488 = vld [vmem:[%s373 + $0x180] sm:$0xff]
        %v489 = vld [vmem:[%s373 + $0x188] sm:$0xff]
        %v490 = vld [vmem:[%s373 + $0x190] sm:$0xff]
        %v491 = vld [vmem:[%s373 + $0x198] sm:$0xff]
        %v492 = vld [vmem:[%s373 + $0x1a0] sm:$0xff]
        %v493 = vld [vmem:[%s373 + $0x1a8] sm:$0xff]
        %v494 = vld [vmem:[%s373 + $0x1b0] sm:$0xff]
        %v495 = vld [vmem:[%s373 + $0x1b8] sm:$0xff]
        %v496 = vld [vmem:[%s373 + $0x1c0] sm:$0xff]
        %v497 = vld [vmem:[%s373 + $0x1c8] sm:$0xff]
        %v498 = vld [vmem:[%s373 + $0x1d0] sm:$0xff]
        %v499 = vld [vmem:[%s373 + $0x1d8] sm:$0xff]
        %v500 = vld [vmem:[%s373 + $0x1e0] sm:$0xff]
        %v501 = vld [vmem:[%s373 + $0x1e8] sm:$0xff]
        %v502 = vld [vmem:[%s373 + $0x1f0] sm:$0xff]
        %v503 = vld [vmem:[%s373 + $0x1f8] sm:$0xff]
        %v504 = vld [vmem:[%s373 + $0x200] sm:$0xff]
        %v505 = vld [vmem:[%s373 + $0x208] sm:$0xff]
        %v506 = vld [vmem:[%s373 + $0x210] sm:$0xff]
        %v507 = vld [vmem:[%s373 + $0x218] sm:$0xff]
        %v508 = vld [vmem:[%s373 + $0x220] sm:$0xff]
        %v509 = vld [vmem:[%s373 + $0x228] sm:$0xff]
        %v510 = vld [vmem:[%s373 + $0x230] sm:$0xff]
        %v511 = vld [vmem:[%s373 + $0x238] sm:$0xff]
        %v512 = vld [vmem:[%s373 + $0x240] sm:$0xff]
        %v513 = vld [vmem:[%s373 + $0x248] sm:$0xff]
        %v514 = vld [vmem:[%s373 + $0x250] sm:$0xff]
        %v515 = vld [vmem:[%s373 + $0x258] sm:$0xff]
        %v516 = vld [vmem:[%s373 + $0x260] sm:$0xff]
        %v517 = vld [vmem:[%s373 + $0x268] sm:$0xff]
        %v518 = vld [vmem:[%s373 + $0x270] sm:$0xff]
        %v519 = vld [vmem:[%s373 + $0x278] sm:$0xff]
        %v520 = vld [vmem:[%s373 + $0x280] sm:$0xff]
        %v521 = vld [vmem:[%s373 + $0x288] sm:$0xff]
        %v522 = vld [vmem:[%s373 + $0x290] sm:$0xff]
        %v523 = vld [vmem:[%s373 + $0x298] sm:$0xff]
        %v524 = vld [vmem:[%s373 + $0x2a0] sm:$0xff]
        %v525 = vld [vmem:[%s373 + $0x2a8] sm:$0xff]
        %v526 = vld [vmem:[%s373 + $0x2b0] sm:$0xff]
        %v527 = vld [vmem:[%s373 + $0x2b8] sm:$0xff]
        %v528 = vld [vmem:[%s373 + $0x2c0] sm:$0xff]
        %v529 = vld [vmem:[%s373 + $0x2c8] sm:$0xff]
        %v530 = vld [vmem:[%s373 + $0x2d0] sm:$0xff]
        %v531 = vld [vmem:[%s373 + $0x2d8] sm:$0xff]
        %v532 = vld [vmem:[%s373 + $0x2e0] sm:$0xff]
        %v533 = vld [vmem:[%s373 + $0x2e8] sm:$0xff]
        %v534 = vld [vmem:[%s373 + $0x2f0] sm:$0xff]
        %v535 = vld [vmem:[%s373 + $0x2f8] sm:$0xff]
        %v536 = vld [vmem:[%s373 + $0x300] sm:$0xff]
        %v537 = vld [vmem:[%s373 + $0x308] sm:$0xff]
        %v538 = vld [vmem:[%s373 + $0x310] sm:$0xff]
        %v539 = vld [vmem:[%s373 + $0x318] sm:$0xff]
        %v540 = vld [vmem:[%s373 + $0x320] sm:$0xff]
        %v541 = vld [vmem:[%s373 + $0x328] sm:$0xff]
        %v542 = vld [vmem:[%s373 + $0x330] sm:$0xff]
        %v543 = vld [vmem:[%s373 + $0x338] sm:$0xff]
        %v544 = vld [vmem:[%s373 + $0x340] sm:$0xff]
        %v545 = vld [vmem:[%s373 + $0x348] sm:$0xff]
        %v546 = vld [vmem:[%s373 + $0x350] sm:$0xff]
        %v547 = vld [vmem:[%s373 + $0x358] sm:$0xff]
        %v548 = vld [vmem:[%s373 + $0x360] sm:$0xff]
        %v549 = vld [vmem:[%s373 + $0x368] sm:$0xff]
        %v550 = vld [vmem:[%s373 + $0x370] sm:$0xff]
        %v551 = vld [vmem:[%s373 + $0x378] sm:$0xff]
        %v552 = vld [vmem:[%s373 + $0x380] sm:$0xff]
        %v553 = vld [vmem:[%s373 + $0x388] sm:$0xff]
        %v554 = vld [vmem:[%s373 + $0x390] sm:$0xff]
        %v555 = vld [vmem:[%s373 + $0x398] sm:$0xff]
        %v556 = vld [vmem:[%s373 + $0x3a0] sm:$0xff]
        %v557 = vld [vmem:[%s373 + $0x3a8] sm:$0xff]
        %v558 = vld [vmem:[%s373 + $0x3b0] sm:$0xff]
        %v559 = vld [vmem:[%s373 + $0x3b8] sm:$0xff]
        %v560 = vld [vmem:[%s373 + $0x3c0] sm:$0xff]
        %v561 = vld [vmem:[%s373 + $0x3c8] sm:$0xff]
        %v562 = vld [vmem:[%s373 + $0x3d0] sm:$0xff]
        %v563 = vld [vmem:[%s373 + $0x3d8] sm:$0xff]
        %v564 = vld [vmem:[%s373 + $0x3e0] sm:$0xff]
        %v565 = vld [vmem:[%s373 + $0x3e8] sm:$0xff]
        %v566 = vld [vmem:[%s373 + $0x3f0] sm:$0xff]
        %v567 = vld [vmem:[%s373 + $0x3f8] sm:$0xff]
        %v568 = vld [vmem:[%s373 + $0x400] sm:$0xff]
        %v569 = vld [vmem:[%s373 + $0x408] sm:$0xff]
        %v570 = vld [vmem:[%s373 + $0x410] sm:$0xff]
        %v571 = vld [vmem:[%s373 + $0x418] sm:$0xff]
        %v572 = vld [vmem:[%s373 + $0x420] sm:$0xff]
        %v573 = vld [vmem:[%s373 + $0x428] sm:$0xff]
        %v574 = vld [vmem:[%s373 + $0x430] sm:$0xff]
        %v575 = vld [vmem:[%s373 + $0x438] sm:$0xff]
        %v576 = vld [vmem:[%s373 + $0x440] sm:$0xff]
        %v577 = vld [vmem:[%s373 + $0x448] sm:$0xff]
        %v578 = vld [vmem:[%s373 + $0x450] sm:$0xff]
        %v579 = vld [vmem:[%s373 + $0x458] sm:$0xff]
        %v580 = vld [vmem:[%s373 + $0x460] sm:$0xff]
        %v581 = vld [vmem:[%s373 + $0x468] sm:$0xff]
        %v582 = vld [vmem:[%s373 + $0x470] sm:$0xff]
        %v583 = vld [vmem:[%s373 + $0x478] sm:$0xff]
        %v584 = vld [vmem:[%s373 + $0x480] sm:$0xff]
        %v585 = vld [vmem:[%s373 + $0x488] sm:$0xff]
        %v586 = vld [vmem:[%s373 + $0x490] sm:$0xff]
        %v587 = vld [vmem:[%s373 + $0x498] sm:$0xff]
        %v588 = vld [vmem:[%s373 + $0x4a0] sm:$0xff]
        %v589 = vld [vmem:[%s373 + $0x4a8] sm:$0xff]
        %v590 = vld [vmem:[%s373 + $0x4b0] sm:$0xff]
        %v591 = vld [vmem:[%s373 + $0x4b8] sm:$0xff]
        %v592 = vld [vmem:[%s373 + $0x4c0] sm:$0xff]
        %v593 = vld [vmem:[%s373 + $0x4c8] sm:$0xff]
        %v594 = vld [vmem:[%s373 + $0x4d0] sm:$0xff]
        %v595 = vld [vmem:[%s373 + $0x4d8] sm:$0xff]
        %v596 = vld [vmem:[%s373 + $0x4e0] sm:$0xff]
        %v597 = vld [vmem:[%s373 + $0x4e8] sm:$0xff]
        %v598 = vld [vmem:[%s373 + $0x4f0] sm:$0xff]
        %v599 = vld [vmem:[%s373 + $0x4f8] sm:$0xff]
        %v600 = vld [vmem:[%s373 + $0x500] sm:$0xff]
        %v601 = vld [vmem:[%s373 + $0x508] sm:$0xff]
        %v602 = vld [vmem:[%s373 + $0x510] sm:$0xff]
        %v603 = vld [vmem:[%s373 + $0x518] sm:$0xff]
        %v604 = vld [vmem:[%s373 + $0x520] sm:$0xff]
        %v605 = vld [vmem:[%s373 + $0x528] sm:$0xff]
        %v606 = vld [vmem:[%s373 + $0x530] sm:$0xff]
        %v607 = vld [vmem:[%s373 + $0x538] sm:$0xff]
        %v608 = vld [vmem:[%s373 + $0x540] sm:$0xff]
        %v609 = vld [vmem:[%s373 + $0x548] sm:$0xff]
        %v610 = vld [vmem:[%s373 + $0x550] sm:$0xff]
        %v611 = vld [vmem:[%s373 + $0x558] sm:$0xff]
        %v612 = vld [vmem:[%s373 + $0x560] sm:$0xff]
        %v613 = vld [vmem:[%s373 + $0x568] sm:$0xff]
        %v614 = vld [vmem:[%s373 + $0x570] sm:$0xff]
        %v615 = vld [vmem:[%s373 + $0x578] sm:$0xff]
        %v616 = vld [vmem:[%s373 + $0x580] sm:$0xff]
        %v617 = vld [vmem:[%s373 + $0x588] sm:$0xff]
        %v618 = vld [vmem:[%s373 + $0x590] sm:$0xff]
        %v619 = vld [vmem:[%s373 + $0x598] sm:$0xff]
        %v620 = vld [vmem:[%s373 + $0x5a0] sm:$0xff]
        %v621 = vld [vmem:[%s373 + $0x5a8] sm:$0xff]
        %v622 = vld [vmem:[%s373 + $0x5b0] sm:$0xff]
        %v623 = vld [vmem:[%s373 + $0x5b8] sm:$0xff]
        %v624 = vld [vmem:[%s373 + $0x5c0] sm:$0xff]
        %v625 = vld [vmem:[%s373 + $0x5c8] sm:$0xff]
        %v626 = vld [vmem:[%s373 + $0x5d0] sm:$0xff]
        %v627 = vld [vmem:[%s373 + $0x5d8] sm:$0xff]
        %v628 = vld [vmem:[%s373 + $0x5e0] sm:$0xff]
        %v629 = vld [vmem:[%s373 + $0x5e8] sm:$0xff]
        %v630 = vld [vmem:[%s373 + $0x5f0] sm:$0xff]
        %v631 = vld [vmem:[%s373 + $0x5f8] sm:$0xff]
        %v632 = vld [vmem:[%s373 + $0x600] sm:$0xff]
        %v633 = vld [vmem:[%s373 + $0x608] sm:$0xff]
        %v634 = vld [vmem:[%s373 + $0x610] sm:$0xff]
        %v635 = vld [vmem:[%s373 + $0x618] sm:$0xff]
        %v636 = vld [vmem:[%s373 + $0x620] sm:$0xff]
        %v637 = vld [vmem:[%s373 + $0x628] sm:$0xff]
        %v638 = vld [vmem:[%s373 + $0x630] sm:$0xff]
        %v639 = vld [vmem:[%s373 + $0x638] sm:$0xff]
        %v640 = vld [vmem:[%s373 + $0x640] sm:$0xff]
        %v641 = vld [vmem:[%s373 + $0x648] sm:$0xff]
        %v642 = vld [vmem:[%s373 + $0x650] sm:$0xff]
        %v643 = vld [vmem:[%s373 + $0x658] sm:$0xff]
        %v644 = vld [vmem:[%s373 + $0x660] sm:$0xff]
        %v645 = vld [vmem:[%s373 + $0x668] sm:$0xff]
        %v646 = vld [vmem:[%s373 + $0x670] sm:$0xff]
        %v647 = vld [vmem:[%s373 + $0x678] sm:$0xff]
        %v648 = vld [vmem:[%s373 + $0x680] sm:$0xff]
        %v649 = vld [vmem:[%s373 + $0x688] sm:$0xff]
        %v650 = vld [vmem:[%s373 + $0x690] sm:$0xff]
        %v651 = vld [vmem:[%s373 + $0x698] sm:$0xff]
        %v652 = vld [vmem:[%s373 + $0x6a0] sm:$0xff]
        %v653 = vld [vmem:[%s373 + $0x6a8] sm:$0xff]
        %v654 = vld [vmem:[%s373 + $0x6b0] sm:$0xff]
        %v655 = vld [vmem:[%s373 + $0x6b8] sm:$0xff]
        %v656 = vld [vmem:[%s373 + $0x6c0] sm:$0xff]
        %v657 = vld [vmem:[%s373 + $0x6c8] sm:$0xff]
        %v658 = vld [vmem:[%s373 + $0x6d0] sm:$0xff]
        %v659 = vld [vmem:[%s373 + $0x6d8] sm:$0xff]
        %v660 = vld [vmem:[%s373 + $0x6e0] sm:$0xff]
        %v661 = vld [vmem:[%s373 + $0x6e8] sm:$0xff]
        %v662 = vld [vmem:[%s373 + $0x6f0] sm:$0xff]
        %v663 = vld [vmem:[%s373 + $0x6f8] sm:$0xff]
        %v664 = vld [vmem:[%s373 + $0x700] sm:$0xff]
        %v665 = vld [vmem:[%s373 + $0x708] sm:$0xff]
        %v666 = vld [vmem:[%s373 + $0x710] sm:$0xff]
        %v667 = vld [vmem:[%s373 + $0x718] sm:$0xff]
        %v668 = vld [vmem:[%s373 + $0x720] sm:$0xff]
        %v669 = vld [vmem:[%s373 + $0x728] sm:$0xff]
        %v670 = vld [vmem:[%s373 + $0x730] sm:$0xff]
        %v671 = vld [vmem:[%s373 + $0x738] sm:$0xff]
        %v672 = vld [vmem:[%s373 + $0x740] sm:$0xff]
        %v673 = vld [vmem:[%s373 + $0x748] sm:$0xff]
        %v674 = vld [vmem:[%s373 + $0x750] sm:$0xff]
        %v675 = vld [vmem:[%s373 + $0x758] sm:$0xff]
        %v676 = vld [vmem:[%s373 + $0x760] sm:$0xff]
        %v677 = vld [vmem:[%s373 + $0x768] sm:$0xff]
        %v678 = vld [vmem:[%s373 + $0x770] sm:$0xff]
        %v679 = vld [vmem:[%s373 + $0x778] sm:$0xff]
        %v680 = vld [vmem:[%s373 + $0x780] sm:$0xff]
        %v681 = vld [vmem:[%s373 + $0x788] sm:$0xff]
        %v682 = vld [vmem:[%s373 + $0x790] sm:$0xff]
        %v683 = vld [vmem:[%s373 + $0x798] sm:$0xff]
        %v684 = vld [vmem:[%s373 + $0x7a0] sm:$0xff]
        %v685 = vld [vmem:[%s373 + $0x7a8] sm:$0xff]
        %v686 = vld [vmem:[%s373 + $0x7b0] sm:$0xff]
        %v687 = vld [vmem:[%s373 + $0x7b8] sm:$0xff]
        %v688 = vld [vmem:[%s373 + $0x7c0] sm:$0xff]
        %v689 = vld [vmem:[%s373 + $0x7c8] sm:$0xff]
        %v690 = vld [vmem:[%s373 + $0x7d0] sm:$0xff]
        %v691 = vld [vmem:[%s373 + $0x7d8] sm:$0xff]
        %v692 = vld [vmem:[%s373 + $0x7e0] sm:$0xff]
        %v693 = vld [vmem:[%s373 + $0x7e8] sm:$0xff]
        %v694 = vld [vmem:[%s373 + $0x7f0] sm:$0xff]
        %v695 = vld [vmem:[%s373 + $0x7f8] sm:$0xff]
        %v696 = vpack.c.bf16 %v441, %v440
        %v697 = vpack.c.bf16 %v443, %v442
        %v698 = vpack.c.bf16 %v445, %v444
        %v699 = vpack.c.bf16 %v447, %v446
        %v700 = vpack.c.bf16 %v449, %v448
        %v701 = vpack.c.bf16 %v451, %v450
        %v702 = vpack.c.bf16 %v453, %v452
        %v703 = vpack.c.bf16 %v455, %v454
        %v704 = vpack.c.bf16 %v457, %v456
        %v705 = vpack.c.bf16 %v459, %v458
        %v706 = vpack.c.bf16 %v461, %v460
        %v707 = vpack.c.bf16 %v463, %v462
        %v708 = vpack.c.bf16 %v465, %v464
        %v709 = vpack.c.bf16 %v467, %v466
        %v710 = vpack.c.bf16 %v469, %v468
        %v711 = vpack.c.bf16 %v471, %v470
        %v712 = vpack.c.bf16 %v473, %v472
        %v713 = vpack.c.bf16 %v475, %v474
        %v714 = vpack.c.bf16 %v477, %v476
        %v715 = vpack.c.bf16 %v479, %v478
        %v716 = vpack.c.bf16 %v481, %v480
        %v717 = vpack.c.bf16 %v483, %v482
        %v718 = vpack.c.bf16 %v485, %v484
        %v719 = vpack.c.bf16 %v487, %v486
        %v720 = vpack.c.bf16 %v489, %v488
        %v721 = vpack.c.bf16 %v491, %v490
        %v722 = vpack.c.bf16 %v493, %v492
        %v723 = vpack.c.bf16 %v495, %v494
        %v724 = vpack.c.bf16 %v497, %v496
        %v725 = vpack.c.bf16 %v499, %v498
        %v726 = vpack.c.bf16 %v501, %v500
        %v727 = vpack.c.bf16 %v503, %v502
        %v728 = vpack.c.bf16 %v505, %v504
        %v729 = vpack.c.bf16 %v507, %v506
        %v730 = vpack.c.bf16 %v509, %v508
        %v731 = vpack.c.bf16 %v511, %v510
        %v732 = vpack.c.bf16 %v513, %v512
        %v733 = vpack.c.bf16 %v515, %v514
        %v734 = vpack.c.bf16 %v517, %v516
        %v735 = vpack.c.bf16 %v519, %v518
        %v736 = vpack.c.bf16 %v521, %v520
        %v737 = vpack.c.bf16 %v523, %v522
        %v738 = vpack.c.bf16 %v525, %v524
        %v739 = vpack.c.bf16 %v527, %v526
        %v740 = vpack.c.bf16 %v529, %v528
        %v741 = vpack.c.bf16 %v531, %v530
        %v742 = vpack.c.bf16 %v533, %v532
        %v743 = vpack.c.bf16 %v535, %v534
        %v744 = vpack.c.bf16 %v537, %v536
        %v745 = vpack.c.bf16 %v539, %v538
        %v746 = vpack.c.bf16 %v541, %v540
        %v747 = vpack.c.bf16 %v543, %v542
        %v748 = vpack.c.bf16 %v545, %v544
        %v749 = vpack.c.bf16 %v547, %v546
        %v750 = vpack.c.bf16 %v549, %v548
        %v751 = vpack.c.bf16 %v551, %v550
        %v752 = vpack.c.bf16 %v553, %v552
        %v753 = vpack.c.bf16 %v555, %v554
        %v754 = vpack.c.bf16 %v557, %v556
        %v755 = vpack.c.bf16 %v559, %v558
        %v756 = vpack.c.bf16 %v561, %v560
        %v757 = vpack.c.bf16 %v563, %v562
        %v758 = vpack.c.bf16 %v565, %v564
        %v759 = vpack.c.bf16 %v567, %v566
        %v760 = vpack.c.bf16 %v569, %v568
        %v761 = vpack.c.bf16 %v571, %v570
        %v762 = vpack.c.bf16 %v573, %v572
        %v763 = vpack.c.bf16 %v575, %v574
        %v764 = vpack.c.bf16 %v577, %v576
        %v765 = vpack.c.bf16 %v579, %v578
        %v766 = vpack.c.bf16 %v581, %v580
        %v767 = vpack.c.bf16 %v583, %v582
        %v768 = vpack.c.bf16 %v585, %v584
        %v769 = vpack.c.bf16 %v587, %v586
        %v770 = vpack.c.bf16 %v589, %v588
        %v771 = vpack.c.bf16 %v591, %v590
        %v772 = vpack.c.bf16 %v593, %v592
        %v773 = vpack.c.bf16 %v595, %v594
        %v774 = vpack.c.bf16 %v597, %v596
        %v775 = vpack.c.bf16 %v599, %v598
        %v776 = vpack.c.bf16 %v601, %v600
        %v777 = vpack.c.bf16 %v603, %v602
        %v778 = vpack.c.bf16 %v605, %v604
        %v779 = vpack.c.bf16 %v607, %v606
        %v780 = vpack.c.bf16 %v609, %v608
        %v781 = vpack.c.bf16 %v611, %v610
        %v782 = vpack.c.bf16 %v613, %v612
        %v783 = vpack.c.bf16 %v615, %v614
        %v784 = vpack.c.bf16 %v617, %v616
        %v785 = vpack.c.bf16 %v619, %v618
        %v786 = vpack.c.bf16 %v621, %v620
        %v787 = vpack.c.bf16 %v623, %v622
        %v788 = vpack.c.bf16 %v625, %v624
        %v789 = vpack.c.bf16 %v627, %v626
        %v790 = vpack.c.bf16 %v629, %v628
        %v791 = vpack.c.bf16 %v631, %v630
        %v792 = vpack.c.bf16 %v633, %v632
        %v793 = vpack.c.bf16 %v635, %v634
        %v794 = vpack.c.bf16 %v637, %v636
        %v795 = vpack.c.bf16 %v639, %v638
        %v796 = vpack.c.bf16 %v641, %v640
        %v797 = vpack.c.bf16 %v643, %v642
        %v798 = vpack.c.bf16 %v645, %v644
        %v799 = vpack.c.bf16 %v647, %v646
        %v800 = vpack.c.bf16 %v649, %v648
        %v801 = vpack.c.bf16 %v651, %v650
        %v802 = vpack.c.bf16 %v653, %v652
        %v803 = vpack.c.bf16 %v655, %v654
        %v804 = vpack.c.bf16 %v657, %v656
        %v805 = vpack.c.bf16 %v659, %v658
        %v806 = vpack.c.bf16 %v661, %v660
        %v807 = vpack.c.bf16 %v663, %v662
        %v808 = vpack.c.bf16 %v665, %v664
        %v809 = vpack.c.bf16 %v667, %v666
        %v810 = vpack.c.bf16 %v669, %v668
        %v811 = vpack.c.bf16 %v671, %v670
        %v812 = vpack.c.bf16 %v673, %v672
        %v813 = vpack.c.bf16 %v675, %v674
        %v814 = vpack.c.bf16 %v677, %v676
        %v815 = vpack.c.bf16 %v679, %v678
        %v816 = vpack.c.bf16 %v681, %v680
        %v817 = vpack.c.bf16 %v683, %v682
        %v818 = vpack.c.bf16 %v685, %v684
        %v819 = vpack.c.bf16 %v687, %v686
        %v820 = vpack.c.bf16 %v689, %v688
        %v821 = vpack.c.bf16 %v691, %v690
        %v822 = vpack.c.bf16 %v693, %v692
        %v823 = vpack.c.bf16 %v695, %v694
        %v824 = vld [vmem:[#allocation2] sm:$0xff]
        %v825 = vld [vmem:[#allocation2 + $0x8] sm:$0xff]
        %826 = vmatprep.subr.bf16.mxu0 0
        %827 = vmatpush1.bf16.msra.mxu0 %v696
        %828 = vmatprep.subr.bf16.mxu0 0
        %829 = vmatpush1.bf16.msra.mxu0 %v697
        %830 = vmatprep.subr.bf16.mxu0 0
        %831 = vmatpush1.bf16.msra.mxu0 %v698
        %832 = vmatprep.subr.bf16.mxu0 0
        %833 = vmatpush1.bf16.msra.mxu0 %v699
        %834 = vmatprep.subr.bf16.mxu0 0
        %835 = vmatpush1.bf16.msra.mxu0 %v700
        %836 = vmatprep.subr.bf16.mxu0 0
        %837 = vmatpush1.bf16.msra.mxu0 %v701
        %838 = vmatprep.subr.bf16.mxu0 0
        %839 = vmatpush1.bf16.msra.mxu0 %v702
        %840 = vmatprep.subr.bf16.mxu0 0
        %841 = vmatpush1.bf16.msra.mxu0 %v703
        %842 = vmatprep.subr.bf16.mxu0 0
        %843 = vmatpush1.bf16.msra.mxu0 0
        %844 = vmatprep.subr.bf16.mxu0 0
        %845 = vmatpush1.bf16.msra.mxu0 0
        %846 = vmatprep.subr.bf16.mxu0 0
        %847 = vmatpush1.bf16.msra.mxu0 0
        %848 = vmatprep.subr.bf16.mxu0 0
        %849 = vmatpush1.bf16.msra.mxu0 0
        %850 = vmatprep.subr.bf16.mxu0 0
        %851 = vmatpush1.bf16.msra.mxu0 0
        %852 = vmatprep.subr.bf16.mxu0 0
        %853 = vmatpush1.bf16.msra.mxu0 0
        %854 = vmatprep.subr.bf16.mxu0 0
        %855 = vmatpush1.bf16.msra.mxu0 0
        %856 = vmatprep.subr.bf16.mxu0 0
        %857 = vmatpush1.bf16.msra.mxu0 0
        %858 = vmatprep.mubr.bf16.mxu0 0
        %859 = vmatmul.mubr.bf16.gmra.mrb[0].mxu0 %v424
        %v860 = vpop.f32.mrb[0].mxu0
        %v861 = vadd.f32 0.0, %v860
        %v862 = vpop.f32.mrb[0].mxu0
        %v863 = vpop.f32.mrb[0].mxu0
        %v864 = vpop.f32.mrb[0].mxu0
        %865 = vdwg.mxu0
        %866 = vmatprep.subr.bf16.mxu0 0
        %867 = vmatpush1.bf16.msra.mxu0 %v704
        %868 = vmatprep.subr.bf16.mxu0 0
        %869 = vmatpush1.bf16.msra.mxu0 %v705
        %870 = vmatprep.subr.bf16.mxu0 0
        %871 = vmatpush1.bf16.msra.mxu0 %v706
        %872 = vmatprep.subr.bf16.mxu0 0
        %873 = vmatpush1.bf16.msra.mxu0 %v707
        %874 = vmatprep.subr.bf16.mxu0 0
        %875 = vmatpush1.bf16.msra.mxu0 %v708
        %876 = vmatprep.subr.bf16.mxu0 0
        %877 = vmatpush1.bf16.msra.mxu0 %v709
        %878 = vmatprep.subr.bf16.mxu0 0
        %879 = vmatpush1.bf16.msra.mxu0 %v710
        %880 = vmatprep.subr.bf16.mxu0 0
        %881 = vmatpush1.bf16.msra.mxu0 %v711
        %882 = vmatprep.subr.bf16.mxu0 0
        %883 = vmatpush1.bf16.msra.mxu0 0
        %884 = vmatprep.subr.bf16.mxu0 0
        %885 = vmatpush1.bf16.msra.mxu0 0
        %886 = vmatprep.subr.bf16.mxu0 0
        %887 = vmatpush1.bf16.msra.mxu0 0
        %888 = vmatprep.subr.bf16.mxu0 0
        %889 = vmatpush1.bf16.msra.mxu0 0
        %890 = vmatprep.subr.bf16.mxu0 0
        %891 = vmatpush1.bf16.msra.mxu0 0
        %892 = vmatprep.subr.bf16.mxu0 0
        %893 = vmatpush1.bf16.msra.mxu0 0
        %894 = vmatprep.subr.bf16.mxu0 0
        %895 = vmatpush1.bf16.msra.mxu0 0
        %896 = vmatprep.subr.bf16.mxu0 0
        %897 = vmatpush1.bf16.msra.mxu0 0
        %898 = vmatprep.mubr.bf16.mxu0 0
        %899 = vmatmul.mubr.bf16.gmra.mrb[0].mxu0 %v425
        %v900 = vpop.f32.mrb[0].mxu0
        %v901 = vadd.f32 0.0, %v900
        %v902 = vpop.f32.mrb[0].mxu0
        %v903 = vpop.f32.mrb[0].mxu0
        %v904 = vpop.f32.mrb[0].mxu0
        %905 = vdwg.mxu0
        %906 = vmatprep.subr.bf16.mxu0 0
        %907 = vmatpush1.bf16.msra.mxu0 %v712
        %908 = vmatprep.subr.bf16.mxu0 0
        %909 = vmatpush1.bf16.msra.mxu0 %v713
        %910 = vmatprep.subr.bf16.mxu0 0
        %911 = vmatpush1.bf16.msra.mxu0 %v714
        %912 = vmatprep.subr.bf16.mxu0 0
        %913 = vmatpush1.bf16.msra.mxu0 %v715
        %914 = vmatprep.subr.bf16.mxu0 0
        %915 = vmatpush1.bf16.msra.mxu0 %v716
        %916 = vmatprep.subr.bf16.mxu0 0
        %917 = vmatpush1.bf16.msra.mxu0 %v717
        %918 = vmatprep.subr.bf16.mxu0 0
        %919 = vmatpush1.bf16.msra.mxu0 %v718
        %920 = vmatprep.subr.bf16.mxu0 0
        %921 = vmatpush1.bf16.msra.mxu0 %v719
        %922 = vmatprep.subr.bf16.mxu0 0
        %923 = vmatpush1.bf16.msra.mxu0 0
        %924 = vmatprep.subr.bf16.mxu0 0
        %925 = vmatpush1.bf16.msra.mxu0 0
        %926 = vmatprep.subr.bf16.mxu0 0
        %927 = vmatpush1.bf16.msra.mxu0 0
        %928 = vmatprep.subr.bf16.mxu0 0
        %929 = vmatpush1.bf16.msra.mxu0 0
        %930 = vmatprep.subr.bf16.mxu0 0
        %931 = vmatpush1.bf16.msra.mxu0 0
        %932 = vmatprep.subr.bf16.mxu0 0
        %933 = vmatpush1.bf16.msra.mxu0 0
        %934 = vmatprep.subr.bf16.mxu0 0
        %935 = vmatpush1.bf16.msra.mxu0 0
        %936 = vmatprep.subr.bf16.mxu0 0
        %937 = vmatpush1.bf16.msra.mxu0 0
        %938 = vmatprep.mubr.bf16.mxu0 0
        %939 = vmatmul.mubr.bf16.gmra.mrb[0].mxu0 %v426
        %v940 = vpop.f32.mrb[0].mxu0
        %v941 = vadd.f32 0.0, %v940
        %v942 = vpop.f32.mrb[0].mxu0
        %v943 = vpop.f32.mrb[0].mxu0
        %v944 = vpop.f32.mrb[0].mxu0
        %945 = vdwg.mxu0
        %946 = vmatprep.subr.bf16.mxu0 0
        %947 = vmatpush1.bf16.msra.mxu0 %v720
        %948 = vmatprep.subr.bf16.mxu0 0
        %949 = vmatpush1.bf16.msra.mxu0 %v721
        %950 = vmatprep.subr.bf16.mxu0 0
        %951 = vmatpush1.bf16.msra.mxu0 %v722
        %952 = vmatprep.subr.bf16.mxu0 0
        %953 = vmatpush1.bf16.msra.mxu0 %v723
        %954 = vmatprep.subr.bf16.mxu0 0
        %955 = vmatpush1.bf16.msra.mxu0 %v724
        %956 = vmatprep.subr.bf16.mxu0 0
        %957 = vmatpush1.bf16.msra.mxu0 %v725
        %958 = vmatprep.subr.bf16.mxu0 0
        %959 = vmatpush1.bf16.msra.mxu0 %v726
        %960 = vmatprep.subr.bf16.mxu0 0
        %961 = vmatpush1.bf16.msra.mxu0 %v727
        %962 = vmatprep.subr.bf16.mxu0 0
        %963 = vmatpush1.bf16.msra.mxu0 0
        %964 = vmatprep.subr.bf16.mxu0 0
        %965 = vmatpush1.bf16.msra.mxu0 0
        %966 = vmatprep.subr.bf16.mxu0 0
        %967 = vmatpush1.bf16.msra.mxu0 0
        %968 = vmatprep.subr.bf16.mxu0 0
        %969 = vmatpush1.bf16.msra.mxu0 0
        %970 = vmatprep.subr.bf16.mxu0 0
        %971 = vmatpush1.bf16.msra.mxu0 0
        %972 = vmatprep.subr.bf16.mxu0 0
        %973 = vmatpush1.bf16.msra.mxu0 0
        %974 = vmatprep.subr.bf16.mxu0 0
        %975 = vmatpush1.bf16.msra.mxu0 0
        %976 = vmatprep.subr.bf16.mxu0 0
        %977 = vmatpush1.bf16.msra.mxu0 0
        %978 = vmatprep.mubr.bf16.mxu0 0
        %979 = vmatmul.mubr.bf16.gmra.mrb[0].mxu0 %v427
        %v980 = vpop.f32.mrb[0].mxu0
        %v981 = vadd.f32 0.0, %v980
        %v982 = vpop.f32.mrb[0].mxu0
        %v983 = vpop.f32.mrb[0].mxu0
        %v984 = vpop.f32.mrb[0].mxu0
        %985 = vdwg.mxu0
        %986 = vmatprep.subr.bf16.mxu0 0
        %987 = vmatpush1.bf16.msra.mxu0 %v728
        %988 = vmatprep.subr.bf16.mxu0 0
        %989 = vmatpush1.bf16.msra.mxu0 %v729
        %990 = vmatprep.subr.bf16.mxu0 0
        %991 = vmatpush1.bf16.msra.mxu0 %v730
        %992 = vmatprep.subr.bf16.mxu0 0
        %993 = vmatpush1.bf16.msra.mxu0 %v731
        %994 = vmatprep.subr.bf16.mxu0 0
        %995 = vmatpush1.bf16.msra.mxu0 %v732
        %996 = vmatprep.subr.bf16.mxu0 0
        %997 = vmatpush1.bf16.msra.mxu0 %v733
        %998 = vmatprep.subr.bf16.mxu0 0
        %999 = vmatpush1.bf16.msra.mxu0 %v734
        %1000 = vmatprep.subr.bf16.mxu0 0
        %1001 = vmatpush1.bf16.msra.mxu0 %v735
        %1002 = vmatprep.subr.bf16.mxu0 0
        %1003 = vmatpush1.bf16.msra.mxu0 0
        %1004 = vmatprep.subr.bf16.mxu0 0
        %1005 = vmatpush1.bf16.msra.mxu0 0
        %1006 = vmatprep.subr.bf16.mxu0 0
        %1007 = vmatpush1.bf16.msra.mxu0 0
        %1008 = vmatprep.subr.bf16.mxu0 0
        %1009 = vmatpush1.bf16.msra.mxu0 0
        %1010 = vmatprep.subr.bf16.mxu0 0
        %1011 = vmatpush1.bf16.msra.mxu0 0
        %1012 = vmatprep.subr.bf16.mxu0 0
        %1013 = vmatpush1.bf16.msra.mxu0 0
        %1014 = vmatprep.subr.bf16.mxu0 0
        %1015 = vmatpush1.bf16.msra.mxu0 0
        %1016 = vmatprep.subr.bf16.mxu0 0
        %1017 = vmatpush1.bf16.msra.mxu0 0
        %1018 = vmatprep.mubr.bf16.mxu0 0
        %1019 = vmatmul.mubr.bf16.gmra.mrb[0].mxu0 %v428
        %v1020 = vpop.f32.mrb[0].mxu0
        %v1021 = vadd.f32 0.0, %v1020
        %v1022 = vpop.f32.mrb[0].mxu0
        %v1023 = vpop.f32.mrb[0].mxu0
        %v1024 = vpop.f32.mrb[0].mxu0
        %1025 = vdwg.mxu0
        %1026 = vmatprep.subr.bf16.mxu0 0
        %1027 = vmatpush1.bf16.msra.mxu0 %v736
        %1028 = vmatprep.subr.bf16.mxu0 0
        %1029 = vmatpush1.bf16.msra.mxu0 %v737
        %1030 = vmatprep.subr.bf16.mxu0 0
        %1031 = vmatpush1.bf16.msra.mxu0 %v738
        %1032 = vmatprep.subr.bf16.mxu0 0
        %1033 = vmatpush1.bf16.msra.mxu0 %v739
        %1034 = vmatprep.subr.bf16.mxu0 0
        %1035 = vmatpush1.bf16.msra.mxu0 %v740
        %1036 = vmatprep.subr.bf16.mxu0 0
        %1037 = vmatpush1.bf16.msra.mxu0 %v741
        %1038 = vmatprep.subr.bf16.mxu0 0
        %1039 = vmatpush1.bf16.msra.mxu0 %v742
        %1040 = vmatprep.subr.bf16.mxu0 0
        %1041 = vmatpush1.bf16.msra.mxu0 %v743
        %1042 = vmatprep.subr.bf16.mxu0 0
        %1043 = vmatpush1.bf16.msra.mxu0 0
        %1044 = vmatprep.subr.bf16.mxu0 0
        %1045 = vmatpush1.bf16.msra.mxu0 0
        %1046 = vmatprep.subr.bf16.mxu0 0
        %1047 = vmatpush1.bf16.msra.mxu0 0
        %1048 = vmatprep.subr.bf16.mxu0 0
        %1049 = vmatpush1.bf16.msra.mxu0 0
        %1050 = vmatprep.subr.bf16.mxu0 0
        %1051 = vmatpush1.bf16.msra.mxu0 0
        %1052 = vmatprep.subr.bf16.mxu0 0
        %1053 = vmatpush1.bf16.msra.mxu0 0
        %1054 = vmatprep.subr.bf16.mxu0 0
        %1055 = vmatpush1.bf16.msra.mxu0 0
        %1056 = vmatprep.subr.bf16.mxu0 0
        %1057 = vmatpush1.bf16.msra.mxu0 0
        %1058 = vmatprep.mubr.bf16.mxu0 0
        %1059 = vmatmul.mubr.bf16.gmra.mrb[0].mxu0 %v429
        %v1060 = vpop.f32.mrb[0].mxu0
        %v1061 = vadd.f32 0.0, %v1060
        %v1062 = vpop.f32.mrb[0].mxu0
        %v1063 = vpop.f32.mrb[0].mxu0
        %v1064 = vpop.f32.mrb[0].mxu0
        %1065 = vdwg.mxu0
        %1066 = vmatprep.subr.bf16.mxu0 0
        %1067 = vmatpush1.bf16.msra.mxu0 %v744
        %1068 = vmatprep.subr.bf16.mxu0 0
        %1069 = vmatpush1.bf16.msra.mxu0 %v745
        %1070 = vmatprep.subr.bf16.mxu0 0
        %1071 = vmatpush1.bf16.msra.mxu0 %v746
        %1072 = vmatprep.subr.bf16.mxu0 0
        %1073 = vmatpush1.bf16.msra.mxu0 %v747
        %1074 = vmatprep.subr.bf16.mxu0 0
        %1075 = vmatpush1.bf16.msra.mxu0 %v748
        %1076 = vmatprep.subr.bf16.mxu0 0
        %1077 = vmatpush1.bf16.msra.mxu0 %v749
        %1078 = vmatprep.subr.bf16.mxu0 0
        %1079 = vmatpush1.bf16.msra.mxu0 %v750
        %1080 = vmatprep.subr.bf16.mxu0 0
        %1081 = vmatpush1.bf16.msra.mxu0 %v751
        %1082 = vmatprep.subr.bf16.mxu0 0
        %1083 = vmatpush1.bf16.msra.mxu0 0
        %1084 = vmatprep.subr.bf16.mxu0 0
        %1085 = vmatpush1.bf16.msra.mxu0 0
        %1086 = vmatprep.subr.bf16.mxu0 0
        %1087 = vmatpush1.bf16.msra.mxu0 0
        %1088 = vmatprep.subr.bf16.mxu0 0
        %1089 = vmatpush1.bf16.msra.mxu0 0
        %1090 = vmatprep.subr.bf16.mxu0 0
        %1091 = vmatpush1.bf16.msra.mxu0 0
        %1092 = vmatprep.subr.bf16.mxu0 0
        %1093 = vmatpush1.bf16.msra.mxu0 0
        %1094 = vmatprep.subr.bf16.mxu0 0
        %1095 = vmatpush1.bf16.msra.mxu0 0
        %1096 = vmatprep.subr.bf16.mxu0 0
        %1097 = vmatpush1.bf16.msra.mxu0 0
        %1098 = vmatprep.mubr.bf16.mxu0 0
        %1099 = vmatmul.mubr.bf16.gmra.mrb[0].mxu0 %v430
        %v1100 = vpop.f32.mrb[0].mxu0
        %v1101 = vadd.f32 0.0, %v1100
        %v1102 = vpop.f32.mrb[0].mxu0
        %v1103 = vpop.f32.mrb[0].mxu0
        %v1104 = vpop.f32.mrb[0].mxu0
        %1105 = vdwg.mxu0
        %1106 = vmatprep.subr.bf16.mxu0 0
        %1107 = vmatpush1.bf16.msra.mxu0 %v752
        %1108 = vmatprep.subr.bf16.mxu0 0
        %1109 = vmatpush1.bf16.msra.mxu0 %v753
        %1110 = vmatprep.subr.bf16.mxu0 0
        %1111 = vmatpush1.bf16.msra.mxu0 %v754
        %1112 = vmatprep.subr.bf16.mxu0 0
        %1113 = vmatpush1.bf16.msra.mxu0 %v755
        %1114 = vmatprep.subr.bf16.mxu0 0
        %1115 = vmatpush1.bf16.msra.mxu0 %v756
        %1116 = vmatprep.subr.bf16.mxu0 0
        %1117 = vmatpush1.bf16.msra.mxu0 %v757
        %1118 = vmatprep.subr.bf16.mxu0 0
        %1119 = vmatpush1.bf16.msra.mxu0 %v758
        %1120 = vmatprep.subr.bf16.mxu0 0
        %1121 = vmatpush1.bf16.msra.mxu0 %v759
        %1122 = vmatprep.subr.bf16.mxu0 0
        %1123 = vmatpush1.bf16.msra.mxu0 0
        %1124 = vmatprep.subr.bf16.mxu0 0
        %1125 = vmatpush1.bf16.msra.mxu0 0
        %1126 = vmatprep.subr.bf16.mxu0 0
        %1127 = vmatpush1.bf16.msra.mxu0 0
        %1128 = vmatprep.subr.bf16.mxu0 0
        %1129 = vmatpush1.bf16.msra.mxu0 0
        %1130 = vmatprep.subr.bf16.mxu0 0
        %1131 = vmatpush1.bf16.msra.mxu0 0
        %1132 = vmatprep.subr.bf16.mxu0 0
        %1133 = vmatpush1.bf16.msra.mxu0 0
        %1134 = vmatprep.subr.bf16.mxu0 0
        %1135 = vmatpush1.bf16.msra.mxu0 0
        %1136 = vmatprep.subr.bf16.mxu0 0
        %1137 = vmatpush1.bf16.msra.mxu0 0
        %1138 = vmatprep.mubr.bf16.mxu0 0
        %1139 = vmatmul.mubr.bf16.gmra.mrb[0].mxu0 %v431
        %v1140 = vpop.f32.mrb[0].mxu0
        %v1141 = vadd.f32 0.0, %v1140
        %v1142 = vpop.f32.mrb[0].mxu0
        %v1143 = vpop.f32.mrb[0].mxu0
        %v1144 = vpop.f32.mrb[0].mxu0
        %1145 = vdwg.mxu0
        %1146 = vmatprep.subr.bf16.mxu0 0
        %1147 = vmatpush1.bf16.msra.mxu0 %v760
        %1148 = vmatprep.subr.bf16.mxu0 0
        %1149 = vmatpush1.bf16.msra.mxu0 %v761
        %1150 = vmatprep.subr.bf16.mxu0 0
        %1151 = vmatpush1.bf16.msra.mxu0 %v762
        %1152 = vmatprep.subr.bf16.mxu0 0
        %1153 = vmatpush1.bf16.msra.mxu0 %v763
        %1154 = vmatprep.subr.bf16.mxu0 0
        %1155 = vmatpush1.bf16.msra.mxu0 %v764
        %1156 = vmatprep.subr.bf16.mxu0 0
        %1157 = vmatpush1.bf16.msra.mxu0 %v765
        %1158 = vmatprep.subr.bf16.mxu0 0
        %1159 = vmatpush1.bf16.msra.mxu0 %v766
        %1160 = vmatprep.subr.bf16.mxu0 0
        %1161 = vmatpush1.bf16.msra.mxu0 %v767
        %1162 = vmatprep.subr.bf16.mxu0 0
        %1163 = vmatpush1.bf16.msra.mxu0 0
        %1164 = vmatprep.subr.bf16.mxu0 0
        %1165 = vmatpush1.bf16.msra.mxu0 0
        %1166 = vmatprep.subr.bf16.mxu0 0
        %1167 = vmatpush1.bf16.msra.mxu0 0
        %1168 = vmatprep.subr.bf16.mxu0 0
        %1169 = vmatpush1.bf16.msra.mxu0 0
        %1170 = vmatprep.subr.bf16.mxu0 0
        %1171 = vmatpush1.bf16.msra.mxu0 0
        %1172 = vmatprep.subr.bf16.mxu0 0
        %1173 = vmatpush1.bf16.msra.mxu0 0
        %1174 = vmatprep.subr.bf16.mxu0 0
        %1175 = vmatpush1.bf16.msra.mxu0 0
        %1176 = vmatprep.subr.bf16.mxu0 0
        %1177 = vmatpush1.bf16.msra.mxu0 0
        %1178 = vmatprep.mubr.bf16.mxu0 0
        %1179 = vmatmul.mubr.bf16.gmra.mrb[0].mxu0 %v432
        %v1180 = vpop.f32.mrb[0].mxu0
        %v1181 = vadd.f32 0.0, %v1180
        %v1182 = vpop.f32.mrb[0].mxu0
        %v1183 = vpop.f32.mrb[0].mxu0
        %v1184 = vpop.f32.mrb[0].mxu0
        %1185 = vdwg.mxu0
        %1186 = vmatprep.subr.bf16.mxu0 0
        %1187 = vmatpush1.bf16.msra.mxu0 %v768
        %1188 = vmatprep.subr.bf16.mxu0 0
        %1189 = vmatpush1.bf16.msra.mxu0 %v769
        %1190 = vmatprep.subr.bf16.mxu0 0
        %1191 = vmatpush1.bf16.msra.mxu0 %v770
        %1192 = vmatprep.subr.bf16.mxu0 0
        %1193 = vmatpush1.bf16.msra.mxu0 %v771
        %1194 = vmatprep.subr.bf16.mxu0 0
        %1195 = vmatpush1.bf16.msra.mxu0 %v772
        %1196 = vmatprep.subr.bf16.mxu0 0
        %1197 = vmatpush1.bf16.msra.mxu0 %v773
        %1198 = vmatprep.subr.bf16.mxu0 0
        %1199 = vmatpush1.bf16.msra.mxu0 %v774
        %1200 = vmatprep.subr.bf16.mxu0 0
        %1201 = vmatpush1.bf16.msra.mxu0 %v775
        %1202 = vmatprep.subr.bf16.mxu0 0
        %1203 = vmatpush1.bf16.msra.mxu0 0
        %1204 = vmatprep.subr.bf16.mxu0 0
        %1205 = vmatpush1.bf16.msra.mxu0 0
        %1206 = vmatprep.subr.bf16.mxu0 0
        %1207 = vmatpush1.bf16.msra.mxu0 0
        %1208 = vmatprep.subr.bf16.mxu0 0
        %1209 = vmatpush1.bf16.msra.mxu0 0
        %1210 = vmatprep.subr.bf16.mxu0 0
        %1211 = vmatpush1.bf16.msra.mxu0 0
        %1212 = vmatprep.subr.bf16.mxu0 0
        %1213 = vmatpush1.bf16.msra.mxu0 0
        %1214 = vmatprep.subr.bf16.mxu0 0
        %1215 = vmatpush1.bf16.msra.mxu0 0
        %1216 = vmatprep.subr.bf16.mxu0 0
        %1217 = vmatpush1.bf16.msra.mxu0 0
        %1218 = vmatprep.mubr.bf16.mxu0 0
        %1219 = vmatmul.mubr.bf16.gmra.mrb[0].mxu0 %v433
        %v1220 = vpop.f32.mrb[0].mxu0
        %v1221 = vadd.f32 0.0, %v1220
        %v1222 = vpop.f32.mrb[0].mxu0
        %v1223 = vpop.f32.mrb[0].mxu0
        %v1224 = vpop.f32.mrb[0].mxu0
        %1225 = vdwg.mxu0
        %1226 = vmatprep.subr.bf16.mxu0 0
        %1227 = vmatpush1.bf16.msra.mxu0 %v776
        %1228 = vmatprep.subr.bf16.mxu0 0
        %1229 = vmatpush1.bf16.msra.mxu0 %v777
        %1230 = vmatprep.subr.bf16.mxu0 0
        %1231 = vmatpush1.bf16.msra.mxu0 %v778
        %1232 = vmatprep.subr.bf16.mxu0 0
        %1233 = vmatpush1.bf16.msra.mxu0 %v779
        %1234 = vmatprep.subr.bf16.mxu0 0
        %1235 = vmatpush1.bf16.msra.mxu0 %v780
        %1236 = vmatprep.subr.bf16.mxu0 0
        %1237 = vmatpush1.bf16.msra.mxu0 %v781
        %1238 = vmatprep.subr.bf16.mxu0 0
        %1239 = vmatpush1.bf16.msra.mxu0 %v782
        %1240 = vmatprep.subr.bf16.mxu0 0
        %1241 = vmatpush1.bf16.msra.mxu0 %v783
        %1242 = vmatprep.subr.bf16.mxu0 0
        %1243 = vmatpush1.bf16.msra.mxu0 0
        %1244 = vmatprep.subr.bf16.mxu0 0
        %1245 = vmatpush1.bf16.msra.mxu0 0
        %1246 = vmatprep.subr.bf16.mxu0 0
        %1247 = vmatpush1.bf16.msra.mxu0 0
        %1248 = vmatprep.subr.bf16.mxu0 0
        %1249 = vmatpush1.bf16.msra.mxu0 0
        %1250 = vmatprep.subr.bf16.mxu0 0
        %1251 = vmatpush1.bf16.msra.mxu0 0
        %1252 = vmatprep.subr.bf16.mxu0 0
        %1253 = vmatpush1.bf16.msra.mxu0 0
        %1254 = vmatprep.subr.bf16.mxu0 0
        %1255 = vmatpush1.bf16.msra.mxu0 0
        %1256 = vmatprep.subr.bf16.mxu0 0
        %1257 = vmatpush1.bf16.msra.mxu0 0
        %1258 = vmatprep.mubr.bf16.mxu0 0
        %1259 = vmatmul.mubr.bf16.gmra.mrb[0].mxu0 %v434
        %v1260 = vpop.f32.mrb[0].mxu0
        %v1261 = vadd.f32 0.0, %v1260
        %v1262 = vpop.f32.mrb[0].mxu0
        %v1263 = vpop.f32.mrb[0].mxu0
        %v1264 = vpop.f32.mrb[0].mxu0
        %1265 = vdwg.mxu0
        %1266 = vmatprep.subr.bf16.mxu0 0
        %1267 = vmatpush1.bf16.msra.mxu0 %v784
        %1268 = vmatprep.subr.bf16.mxu0 0
        %1269 = vmatpush1.bf16.msra.mxu0 %v785
        %1270 = vmatprep.subr.bf16.mxu0 0
        %1271 = vmatpush1.bf16.msra.mxu0 %v786
        %1272 = vmatprep.subr.bf16.mxu0 0
        %1273 = vmatpush1.bf16.msra.mxu0 %v787
        %1274 = vmatprep.subr.bf16.mxu0 0
        %1275 = vmatpush1.bf16.msra.mxu0 %v788
        %1276 = vmatprep.subr.bf16.mxu0 0
        %1277 = vmatpush1.bf16.msra.mxu0 %v789
        %1278 = vmatprep.subr.bf16.mxu0 0
        %1279 = vmatpush1.bf16.msra.mxu0 %v790
        %1280 = vmatprep.subr.bf16.mxu0 0
        %1281 = vmatpush1.bf16.msra.mxu0 %v791
        %1282 = vmatprep.subr.bf16.mxu0 0
        %1283 = vmatpush1.bf16.msra.mxu0 0
        %1284 = vmatprep.subr.bf16.mxu0 0
        %1285 = vmatpush1.bf16.msra.mxu0 0
        %1286 = vmatprep.subr.bf16.mxu0 0
        %1287 = vmatpush1.bf16.msra.mxu0 0
        %1288 = vmatprep.subr.bf16.mxu0 0
        %1289 = vmatpush1.bf16.msra.mxu0 0
        %1290 = vmatprep.subr.bf16.mxu0 0
        %1291 = vmatpush1.bf16.msra.mxu0 0
        %1292 = vmatprep.subr.bf16.mxu0 0
        %1293 = vmatpush1.bf16.msra.mxu0 0
        %1294 = vmatprep.subr.bf16.mxu0 0
        %1295 = vmatpush1.bf16.msra.mxu0 0
        %1296 = vmatprep.subr.bf16.mxu0 0
        %1297 = vmatpush1.bf16.msra.mxu0 0
        %1298 = vmatprep.mubr.bf16.mxu0 0
        %1299 = vmatmul.mubr.bf16.gmra.mrb[0].mxu0 %v435
        %v1300 = vpop.f32.mrb[0].mxu0
        %v1301 = vadd.f32 0.0, %v1300
        %v1302 = vpop.f32.mrb[0].mxu0
        %v1303 = vpop.f32.mrb[0].mxu0
        %v1304 = vpop.f32.mrb[0].mxu0
        %1305 = vdwg.mxu0
        %1306 = vmatprep.subr.bf16.mxu0 0
        %1307 = vmatpush1.bf16.msra.mxu0 %v792
        %1308 = vmatprep.subr.bf16.mxu0 0
        %1309 = vmatpush1.bf16.msra.mxu0 %v793
        %1310 = vmatprep.subr.bf16.mxu0 0
        %1311 = vmatpush1.bf16.msra.mxu0 %v794
        %1312 = vmatprep.subr.bf16.mxu0 0
        %1313 = vmatpush1.bf16.msra.mxu0 %v795
        %1314 = vmatprep.subr.bf16.mxu0 0
        %1315 = vmatpush1.bf16.msra.mxu0 %v796
        %1316 = vmatprep.subr.bf16.mxu0 0
        %1317 = vmatpush1.bf16.msra.mxu0 %v797
        %1318 = vmatprep.subr.bf16.mxu0 0
        %1319 = vmatpush1.bf16.msra.mxu0 %v798
        %1320 = vmatprep.subr.bf16.mxu0 0
        %1321 = vmatpush1.bf16.msra.mxu0 %v799
        %1322 = vmatprep.subr.bf16.mxu0 0
        %1323 = vmatpush1.bf16.msra.mxu0 0
        %1324 = vmatprep.subr.bf16.mxu0 0
        %1325 = vmatpush1.bf16.msra.mxu0 0
        %1326 = vmatprep.subr.bf16.mxu0 0
        %1327 = vmatpush1.bf16.msra.mxu0 0
        %1328 = vmatprep.subr.bf16.mxu0 0
        %1329 = vmatpush1.bf16.msra.mxu0 0
        %1330 = vmatprep.subr.bf16.mxu0 0
        %1331 = vmatpush1.bf16.msra.mxu0 0
        %1332 = vmatprep.subr.bf16.mxu0 0
        %1333 = vmatpush1.bf16.msra.mxu0 0
        %1334 = vmatprep.subr.bf16.mxu0 0
        %1335 = vmatpush1.bf16.msra.mxu0 0
        %1336 = vmatprep.subr.bf16.mxu0 0
        %1337 = vmatpush1.bf16.msra.mxu0 0
        %1338 = vmatprep.mubr.bf16.mxu0 0
        %1339 = vmatmul.mubr.bf16.gmra.mrb[0].mxu0 %v436
        %v1340 = vpop.f32.mrb[0].mxu0
        %v1341 = vadd.f32 0.0, %v1340
        %v1342 = vpop.f32.mrb[0].mxu0
        %v1343 = vpop.f32.mrb[0].mxu0
        %v1344 = vpop.f32.mrb[0].mxu0
        %1345 = vdwg.mxu0
        %1346 = vmatprep.subr.bf16.mxu0 0
        %1347 = vmatpush1.bf16.msra.mxu0 %v800
        %1348 = vmatprep.subr.bf16.mxu0 0
        %1349 = vmatpush1.bf16.msra.mxu0 %v801
        %1350 = vmatprep.subr.bf16.mxu0 0
        %1351 = vmatpush1.bf16.msra.mxu0 %v802
        %1352 = vmatprep.subr.bf16.mxu0 0
        %1353 = vmatpush1.bf16.msra.mxu0 %v803
        %1354 = vmatprep.subr.bf16.mxu0 0
        %1355 = vmatpush1.bf16.msra.mxu0 %v804
        %1356 = vmatprep.subr.bf16.mxu0 0
        %1357 = vmatpush1.bf16.msra.mxu0 %v805
        %1358 = vmatprep.subr.bf16.mxu0 0
        %1359 = vmatpush1.bf16.msra.mxu0 %v806
        %1360 = vmatprep.subr.bf16.mxu0 0
        %1361 = vmatpush1.bf16.msra.mxu0 %v807
        %1362 = vmatprep.subr.bf16.mxu0 0
        %1363 = vmatpush1.bf16.msra.mxu0 0
        %1364 = vmatprep.subr.bf16.mxu0 0
        %1365 = vmatpush1.bf16.msra.mxu0 0
        %1366 = vmatprep.subr.bf16.mxu0 0
        %1367 = vmatpush1.bf16.msra.mxu0 0
        %1368 = vmatprep.subr.bf16.mxu0 0
        %1369 = vmatpush1.bf16.msra.mxu0 0
        %1370 = vmatprep.subr.bf16.mxu0 0
        %1371 = vmatpush1.bf16.msra.mxu0 0
        %1372 = vmatprep.subr.bf16.mxu0 0
        %1373 = vmatpush1.bf16.msra.mxu0 0
        %1374 = vmatprep.subr.bf16.mxu0 0
        %1375 = vmatpush1.bf16.msra.mxu0 0
        %1376 = vmatprep.subr.bf16.mxu0 0
        %1377 = vmatpush1.bf16.msra.mxu0 0
        %1378 = vmatprep.mubr.bf16.mxu0 0
        %1379 = vmatmul.mubr.bf16.gmra.mrb[0].mxu0 %v437
        %v1380 = vpop.f32.mrb[0].mxu0
        %v1381 = vadd.f32 0.0, %v1380
        %v1382 = vpop.f32.mrb[0].mxu0
        %v1383 = vpop.f32.mrb[0].mxu0
        %v1384 = vpop.f32.mrb[0].mxu0
        %1385 = vdwg.mxu0
        %1386 = vmatprep.subr.bf16.mxu0 0
        %1387 = vmatpush1.bf16.msra.mxu0 %v808
        %1388 = vmatprep.subr.bf16.mxu0 0
        %1389 = vmatpush1.bf16.msra.mxu0 %v809
        %1390 = vmatprep.subr.bf16.mxu0 0
        %1391 = vmatpush1.bf16.msra.mxu0 %v810
        %1392 = vmatprep.subr.bf16.mxu0 0
        %1393 = vmatpush1.bf16.msra.mxu0 %v811
        %1394 = vmatprep.subr.bf16.mxu0 0
        %1395 = vmatpush1.bf16.msra.mxu0 %v812
        %1396 = vmatprep.subr.bf16.mxu0 0
        %1397 = vmatpush1.bf16.msra.mxu0 %v813
        %1398 = vmatprep.subr.bf16.mxu0 0
        %1399 = vmatpush1.bf16.msra.mxu0 %v814
        %1400 = vmatprep.subr.bf16.mxu0 0
        %1401 = vmatpush1.bf16.msra.mxu0 %v815
        %1402 = vmatprep.subr.bf16.mxu0 0
        %1403 = vmatpush1.bf16.msra.mxu0 0
        %1404 = vmatprep.subr.bf16.mxu0 0
        %1405 = vmatpush1.bf16.msra.mxu0 0
        %1406 = vmatprep.subr.bf16.mxu0 0
        %1407 = vmatpush1.bf16.msra.mxu0 0
        %1408 = vmatprep.subr.bf16.mxu0 0
        %1409 = vmatpush1.bf16.msra.mxu0 0
        %1410 = vmatprep.subr.bf16.mxu0 0
        %1411 = vmatpush1.bf16.msra.mxu0 0
        %1412 = vmatprep.subr.bf16.mxu0 0
        %1413 = vmatpush1.bf16.msra.mxu0 0
        %1414 = vmatprep.subr.bf16.mxu0 0
        %1415 = vmatpush1.bf16.msra.mxu0 0
        %1416 = vmatprep.subr.bf16.mxu0 0
        %1417 = vmatpush1.bf16.msra.mxu0 0
        %1418 = vmatprep.mubr.bf16.mxu0 0
        %1419 = vmatmul.mubr.bf16.gmra.mrb[0].mxu0 %v438
        %v1420 = vpop.f32.mrb[0].mxu0
        %v1421 = vadd.f32 0.0, %v1420
        %v1422 = vpop.f32.mrb[0].mxu0
        %v1423 = vpop.f32.mrb[0].mxu0
        %v1424 = vpop.f32.mrb[0].mxu0
        %1425 = vdwg.mxu0
        %1426 = vmatprep.subr.bf16.mxu0 0
        %1427 = vmatpush1.bf16.msra.mxu0 %v816
        %1428 = vmatprep.subr.bf16.mxu0 0
        %1429 = vmatpush1.bf16.msra.mxu0 %v817
        %1430 = vmatprep.subr.bf16.mxu0 0
        %1431 = vmatpush1.bf16.msra.mxu0 %v818
        %1432 = vmatprep.subr.bf16.mxu0 0
        %1433 = vmatpush1.bf16.msra.mxu0 %v819
        %1434 = vmatprep.subr.bf16.mxu0 0
        %1435 = vmatpush1.bf16.msra.mxu0 %v820
        %1436 = vmatprep.subr.bf16.mxu0 0
        %1437 = vmatpush1.bf16.msra.mxu0 %v821
        %1438 = vmatprep.subr.bf16.mxu0 0
        %1439 = vmatpush1.bf16.msra.mxu0 %v822
        %1440 = vmatprep.subr.bf16.mxu0 0
        %1441 = vmatpush1.bf16.msra.mxu0 %v823
        %1442 = vmatprep.subr.bf16.mxu0 0
        %1443 = vmatpush1.bf16.msra.mxu0 0
        %1444 = vmatprep.subr.bf16.mxu0 0
        %1445 = vmatpush1.bf16.msra.mxu0 0
        %1446 = vmatprep.subr.bf16.mxu0 0
        %1447 = vmatpush1.bf16.msra.mxu0 0
        %1448 = vmatprep.subr.bf16.mxu0 0
        %1449 = vmatpush1.bf16.msra.mxu0 0
        %1450 = vmatprep.subr.bf16.mxu0 0
        %1451 = vmatpush1.bf16.msra.mxu0 0
        %1452 = vmatprep.subr.bf16.mxu0 0
        %1453 = vmatpush1.bf16.msra.mxu0 0
        %1454 = vmatprep.subr.bf16.mxu0 0
        %1455 = vmatpush1.bf16.msra.mxu0 0
        %1456 = vmatprep.subr.bf16.mxu0 0
        %1457 = vmatpush1.bf16.msra.mxu0 0
        %1458 = vmatprep.mubr.bf16.mxu0 0
        %1459 = vmatmul.mubr.bf16.gmra.mrb[0].mxu0 %v439
        %v1460 = vpop.f32.mrb[0].mxu0
        %v1461 = vadd.f32 0.0, %v1460
        %v1462 = vpop.f32.mrb[0].mxu0
        %v1463 = vpop.f32.mrb[0].mxu0
        %v1464 = vpop.f32.mrb[0].mxu0
        %1465 = vdwg.mxu0
        %v1482 = vrot.slane %v901, 7
        %vm1483 = vcmask 1041409
        %v1484 = vsel %vm1483, %v1482, %v861
        %v1485 = vrot.slane %v941, 6
        %vm1486 = vcmask 1042434
        %v1487 = vsel %vm1486, %v1485, %v1484
        %v1488 = vrot.slane %v981, 5
        %vm1489 = vcmask 1043459
        %v1490 = vsel %vm1489, %v1488, %v1487
        %v1491 = vrot.slane %v1021, 4
        %vm1492 = vcmask 1044484
        %v1493 = vsel %vm1492, %v1491, %v1490
        %v1494 = vrot.slane %v1061, 3
        %vm1495 = vcmask 1045509
        %v1496 = vsel %vm1495, %v1494, %v1493
        %v1497 = vrot.slane %v1101, 2
        %vm1498 = vcmask 1046534
        %v1499 = vsel %vm1498, %v1497, %v1496
        %v1500 = vrot.slane %v1141, 1
        %vm1501 = vcmask 1047559
        %v1502 = vsel %vm1501, %v1500, %v1499
        %v1503 = vrot.slane %v1221, 7
        %v1504 = vsel %vm1483, %v1503, %v1181
        %v1505 = vrot.slane %v1261, 6
        %v1506 = vsel %vm1486, %v1505, %v1504
        %v1507 = vrot.slane %v1301, 5
        %v1508 = vsel %vm1489, %v1507, %v1506
        %v1509 = vrot.slane %v1341, 4
        %v1510 = vsel %vm1492, %v1509, %v1508
        %v1511 = vrot.slane %v1381, 3
        %v1512 = vsel %vm1495, %v1511, %v1510
        %v1513 = vrot.slane %v1421, 2
        %v1514 = vsel %vm1498, %v1513, %v1512
        %v1515 = vrot.slane %v1461, 1
        %v1516 = vsel %vm1501, %v1515, %v1514
        %v1519 = vadd.f32 %v824, %v1502
        %v1520 = vadd.f32 %v825, %v1516
        %1521 = vst [vmem:[#allocation2] sm:$0xff] %v1519
        %1522 = vst [vmem:[#allocation2 + $0x8] sm:$0xff] %v1520
        %v1523 = vld [vmem:[#allocation3] sm:$0xff]
        %v1524 = vld [vmem:[#allocation3 + $0x8] sm:$0xff]
        %v1525 = vunpack.c.l.bf16 %v424
        %v1526 = vunpack.c.l.bf16 %v425
        %v1527 = vunpack.c.l.bf16 %v426
        %v1528 = vunpack.c.l.bf16 %v427
        %v1529 = vunpack.c.l.bf16 %v428
        %v1530 = vunpack.c.l.bf16 %v429
        %v1531 = vunpack.c.l.bf16 %v430
        %v1532 = vunpack.c.l.bf16 %v431
        %v1533 = vunpack.c.l.bf16 %v432
        %v1534 = vunpack.c.l.bf16 %v433
        %v1535 = vunpack.c.l.bf16 %v434
        %v1536 = vunpack.c.l.bf16 %v435
        %v1537 = vunpack.c.l.bf16 %v436
        %v1538 = vunpack.c.l.bf16 %v437
        %v1539 = vunpack.c.l.bf16 %v438
        %v1540 = vunpack.c.l.bf16 %v439
        %vm1541 = vcmask 1040384
        %v1542 = vsel %vm1541, %v1525, 0.0
        %1543 = vadd.xlane.f32.xlu0 %v1542
        %v1544 = vpop.xlane.xlu0 %1543
        %v1545 = vsel %vm1541, %v1526, 0.0
        %1546 = vadd.xlane.f32.xlu0 %v1545
        %v1547 = vpop.xlane.xlu0 %1546
        %v1548 = vsel %vm1541, %v1527, 0.0
        %1549 = vadd.xlane.f32.xlu0 %v1548
        %v1550 = vpop.xlane.xlu0 %1549
        %v1551 = vsel %vm1541, %v1528, 0.0
        %1552 = vadd.xlane.f32.xlu0 %v1551
        %v1553 = vpop.xlane.xlu0 %1552
        %v1554 = vsel %vm1541, %v1529, 0.0
        %1555 = vadd.xlane.f32.xlu0 %v1554
        %v1556 = vpop.xlane.xlu0 %1555
        %v1557 = vsel %vm1541, %v1530, 0.0
        %1558 = vadd.xlane.f32.xlu0 %v1557
        %v1559 = vpop.xlane.xlu0 %1558
        %v1560 = vsel %vm1541, %v1531, 0.0
        %1561 = vadd.xlane.f32.xlu0 %v1560
        %v1562 = vpop.xlane.xlu0 %1561
        %v1563 = vsel %vm1541, %v1532, 0.0
        %1564 = vadd.xlane.f32.xlu0 %v1563
        %v1565 = vpop.xlane.xlu0 %1564
        %v1566 = vsel %vm1541, %v1533, 0.0
        %1567 = vadd.xlane.f32.xlu0 %v1566
        %v1568 = vpop.xlane.xlu0 %1567
        %v1569 = vsel %vm1541, %v1534, 0.0
        %1570 = vadd.xlane.f32.xlu0 %v1569
        %v1571 = vpop.xlane.xlu0 %1570
        %v1572 = vsel %vm1541, %v1535, 0.0
        %1573 = vadd.xlane.f32.xlu0 %v1572
        %v1574 = vpop.xlane.xlu0 %1573
        %v1575 = vsel %vm1541, %v1536, 0.0
        %1576 = vadd.xlane.f32.xlu0 %v1575
        %v1577 = vpop.xlane.xlu0 %1576
        %v1578 = vsel %vm1541, %v1537, 0.0
        %1579 = vadd.xlane.f32.xlu0 %v1578
        %v1580 = vpop.xlane.xlu0 %1579
        %v1581 = vsel %vm1541, %v1538, 0.0
        %1582 = vadd.xlane.f32.xlu0 %v1581
        %v1583 = vpop.xlane.xlu0 %1582
        %v1584 = vsel %vm1541, %v1539, 0.0
        %1585 = vadd.xlane.f32.xlu0 %v1584
        %v1586 = vpop.xlane.xlu0 %1585
        %v1587 = vsel %vm1541, %v1540, 0.0
        %1588 = vadd.xlane.f32.xlu0 %v1587
        %v1589 = vpop.xlane.xlu0 %1588
        %v1606 = vrot.slane %v1547, 7
        %v1607 = vsel %vm1483, %v1606, %v1544
        %v1608 = vrot.slane %v1550, 6
        %v1609 = vsel %vm1486, %v1608, %v1607
        %v1610 = vrot.slane %v1553, 5
        %v1611 = vsel %vm1489, %v1610, %v1609
        %v1612 = vrot.slane %v1556, 4
        %v1613 = vsel %vm1492, %v1612, %v1611
        %v1614 = vrot.slane %v1559, 3
        %v1615 = vsel %vm1495, %v1614, %v1613
        %v1616 = vrot.slane %v1562, 2
        %v1617 = vsel %vm1498, %v1616, %v1615
        %v1618 = vrot.slane %v1565, 1
        %v1619 = vsel %vm1501, %v1618, %v1617
        %v1620 = vrot.slane %v1571, 7
        %v1621 = vsel %vm1483, %v1620, %v1568
        %v1622 = vrot.slane %v1574, 6
        %v1623 = vsel %vm1486, %v1622, %v1621
        %v1624 = vrot.slane %v1577, 5
        %v1625 = vsel %vm1489, %v1624, %v1623
        %v1626 = vrot.slane %v1580, 4
        %v1627 = vsel %vm1492, %v1626, %v1625
        %v1628 = vrot.slane %v1583, 3
        %v1629 = vsel %vm1495, %v1628, %v1627
        %v1630 = vrot.slane %v1586, 2
        %v1631 = vsel %vm1498, %v1630, %v1629
        %v1632 = vrot.slane %v1589, 1
        %v1633 = vsel %vm1501, %v1632, %v1631
        %v1636 = vadd.f32 %v1523, %v1619
        %v1637 = vadd.f32 %v1524, %v1633
        %vm1638 = vcmask 7168
        %1639 = vst.msk [vmem:[#allocation3] sm:$0xff] %vm1638, %v1636
        %1640 = vst.msk [vmem:[#allocation3 + $0x8] sm:$0xff] %vm1638, %v1637
        %p1641 = scmp.eq.s32.totalorder %s27, 1
        // Predicated region
        $region94: #{tpu_custom_call.1} parent=72 // pred_check
          %p1642 = pneg %p1641
        $region95: #{tpu_custom_call.1} parent=72 // pred_check_branch
          %1644 = sbr.rel (%p1642) target = $region97
        $region96: #{tpu_custom_call.1} parent=72 // pred_region
          %v1645 = vld [vmem:[#allocation2] sm:$0xff]
          %v1646 = vld [vmem:[#allocation2 + $0x8] sm:$0xff]
          %v1647 = vld [vmem:[#allocation3] sm:$0xff]
          %v1648 = vld [vmem:[#allocation3 + $0x8] sm:$0xff]
          %v1649 = vmax.f32 %v1647, 1.0
          %v1650 = vmax.f32 %v1648, 1.0
          %1652 = vset.pattern.permute.xlu0 0
          %1653 = vperm.xlu0 %1652, %v1649
          %v1654 = vpop.permute.xlu0 %1653
          %1657 = vset.pattern.permute.xlu0 0
          %1658 = vperm.xlu0 %1657, %v1650
          %v1659 = vpop.permute.xlu0 %1658
          %v1661 = vrcp.pop %v1654
          %v1662 = vmul.f32 %v1645, %v1661
          %v1663 = vrcp.pop %v1659
          %v1664 = vmul.f32 %v1646, %v1663
          %v1665 = vpack.c.bf16 %v1664, %v1662
          %v1666 = vld [vmem:[#allocation8] sm:$0xf]
          %v1667 = vld [vmem:[#allocation8 + $0x4] sm:$0xf]
          %v1668 = vld [vmem:[#allocation8 + $0x8] sm:$0xf]
          %v1669 = vld [vmem:[#allocation8 + $0xc] sm:$0xf]
          %v1670 = vld [vmem:[#allocation8 + $0x10] sm:$0xf]
          %v1671 = vld [vmem:[#allocation8 + $0x14] sm:$0xf]
          %v1672 = vld [vmem:[#allocation8 + $0x18] sm:$0xf]
          %v1673 = vld [vmem:[#allocation8 + $0x1c] sm:$0xf]
          %v1674 = vld [vmem:[#allocation8 + $0x20] sm:$0xf]
          %v1675 = vld [vmem:[#allocation8 + $0x24] sm:$0xf]
          %v1676 = vld [vmem:[#allocation8 + $0x28] sm:$0xf]
          %v1677 = vld [vmem:[#allocation8 + $0x2c] sm:$0xf]
          %v1678 = vld [vmem:[#allocation8 + $0x30] sm:$0xf]
          %v1679 = vld [vmem:[#allocation8 + $0x34] sm:$0xf]
          %v1680 = vld [vmem:[#allocation8 + $0x38] sm:$0xf]
          %v1681 = vld [vmem:[#allocation8 + $0x3c] sm:$0xf]
          %v1682 = vld [vmem:[#allocation10] sm:$0x1]
          %v1684 = vlaneseq
          %v1685 = vshrl.u32 %v1684, 7
          %v1686 = vsub.s32 0, %v1685
          %v1687 = vrot.slane %v1682, %v1686
          %v1705 = vunpack.c.l.b16 %v1666
          %v1706 = vunpack.c.l.b16 %v1667
          %v1707 = vunpack.c.l.b16 %v1668
          %v1708 = vunpack.c.l.b16 %v1669
          %v1709 = vunpack.c.l.b16 %v1670
          %v1710 = vunpack.c.l.b16 %v1671
          %v1711 = vunpack.c.l.b16 %v1672
          %v1712 = vunpack.c.l.b16 %v1673
          %v1713 = vunpack.c.l.b16 %v1674
          %v1714 = vunpack.c.l.b16 %v1675
          %v1715 = vunpack.c.l.b16 %v1676
          %v1716 = vunpack.c.l.b16 %v1677
          %v1717 = vunpack.c.l.b16 %v1678
          %v1718 = vunpack.c.l.b16 %v1679
          %v1719 = vunpack.c.l.b16 %v1680
          %v1720 = vunpack.c.l.b16 %v1681
          %v1721 = vpack.c.b16 %v1706, %v1705
          %v1722 = vpack.c.b16 %v1708, %v1707
          %v1723 = vpack.c.b16 %v1710, %v1709
          %v1724 = vpack.c.b16 %v1712, %v1711
          %v1725 = vpack.c.b16 %v1714, %v1713
          %v1726 = vpack.c.b16 %v1716, %v1715
          %v1727 = vpack.c.b16 %v1718, %v1717
          %v1728 = vpack.c.b16 %v1720, %v1719
          %1737 = vmatprep.subr.bf16.mxu0 0
          %1738 = vmatpush1.bf16.msra.mxu0 %v1721
          %1739 = vmatprep.subr.bf16.mxu0 0
          %1740 = vmatpush1.bf16.msra.mxu0 %v1722
          %1741 = vmatprep.subr.bf16.mxu0 0
          %1742 = vmatpush1.bf16.msra.mxu0 %v1723
          %1743 = vmatprep.subr.bf16.mxu0 0
          %1744 = vmatpush1.bf16.msra.mxu0 %v1724
          %1745 = vmatprep.subr.bf16.mxu0 0
          %1746 = vmatpush1.bf16.msra.mxu0 %v1725
          %1747 = vmatprep.subr.bf16.mxu0 0
          %1748 = vmatpush1.bf16.msra.mxu0 %v1726
          %1749 = vmatprep.subr.bf16.mxu0 0
          %1750 = vmatpush1.bf16.msra.mxu0 %v1727
          %1751 = vmatprep.subr.bf16.mxu0 0
          %1752 = vmatpush1.bf16.msra.mxu0 %v1728
          %1753 = vmatprep.subr.bf16.mxu0 0
          %1754 = vmatpush1.bf16.msra.mxu0 0
          %1755 = vmatprep.subr.bf16.mxu0 0
          %1756 = vmatpush1.bf16.msra.mxu0 0
          %1757 = vmatprep.subr.bf16.mxu0 0
          %1758 = vmatpush1.bf16.msra.mxu0 0
          %1759 = vmatprep.subr.bf16.mxu0 0
          %1760 = vmatpush1.bf16.msra.mxu0 0
          %1761 = vmatprep.subr.bf16.mxu0 0
          %1762 = vmatpush1.bf16.msra.mxu0 0
          %1763 = vmatprep.subr.bf16.mxu0 0
          %1764 = vmatpush1.bf16.msra.mxu0 0
          %1765 = vmatprep.subr.bf16.mxu0 0
          %1766 = vmatpush1.bf16.msra.mxu0 0
          %1767 = vmatprep.subr.bf16.mxu0 0
          %1768 = vmatpush1.bf16.msra.mxu0 0
          %1769 = vmatprep.mubr.bf16.mxu0 0
          %1770 = vmatmul.mubr.bf16.gmra.mrb[0].mxu0 %v1665
          %v1771 = vpop.f32.mrb[0].mxu0
          %v1772 = vadd.f32 %v1687, %v1771
          %v1773 = vpop.f32.mrb[0].mxu0
          %v1774 = vpop.f32.mrb[0].mxu0
          %v1775 = vadd.f32 %v1687, %v1774
          %v1776 = vpop.f32.mrb[0].mxu0
          %1777 = vdwg.mxu0
          %1778 = vst [vmem:[%s409] sm:$0xff] %v1772
          %1779 = vst [vmem:[%s409 + $0x8] sm:$0xff] %v1775
        $region97: #{tpu_custom_call.1} parent=72 // pred_fallthru
          _
        %s1780 = sand.u32 %s140, 1
        %s1781 = scalar_lea.sflag [#allocation7], %s1780
        %s1782 = sand.u32 %s140, 1
        %s1783 = smul.addr %s1782, 16
        %s1784 = scalar_lea.vmem [#allocation11], %s1783
        // Predicated region
        $region98: #{tpu_custom_call.1} parent=72 // pred_check
          %p1785 = pneg %p150
        $region99: #{tpu_custom_call.1} parent=72 // pred_check_branch
          %1787 = sbr.rel (%p1785) target = $region101
        $region100: #{tpu_custom_call.1} parent=72 // pred_region
          %s1788 = smul.u32 2, %s26
          %s1790 = ssub.s32 256, 256
          %1791 = vsyncadd %s1781, %s1790
          %s1792 = smul.addr %s1788, 128
          %s1793 = scalar_lea.hbm %s4, %s1792
          %s1794 = sshll.u32 %s1784, 4
          %s1795 = int_to_ptr.vmem [resolvable:$true] %s1794
          %1800 = dma.vmem_to_hbm [thread:$0]  %s1795, 256, %s1793, %s1781, 128, 128, 8
        $region101: #{tpu_custom_call.1} parent=72 // pred_fallthru
          _
      $region73: #{tpu_custom_call.1} parent=5 // pred_fallthru
        _
      %p1801 = scmp.le.s32.totalorder 2, %s17
      // Predicated region
      $region102: #{tpu_custom_call.1} parent=5 // pred_check
        %p1802 = pneg %p1801
      $region103: #{tpu_custom_call.1} parent=5 // pred_check_branch
        %1804 = sbr.rel (%p1802) target = $region105
      $region104: #{tpu_custom_call.1} parent=5 // pred_region
        %s1805 = ssub.s32 %s17, 2
        // Predicated region
        $region106: #{tpu_custom_call.1} parent=104 // pred_check
          %p1806 = pneg %p156
        $region107: #{tpu_custom_call.1} parent=104 // pred_check_branch
          %1808 = sbr.rel (%p1806) target = $region109
        $region108: #{tpu_custom_call.1} parent=104 // pred_region
          %s1809 = sand.u32 %s141, 1
          %s1810 = scalar_lea.sflag [#allocation7], %s1809
          %s1811 = sand.u32 %s141, 1
          %s1812 = smul.addr %s1811, 16
          %s1813 = scalar_lea.vmem [#allocation11], %s1812
          %1814 = dma.done %s1810, 256
        $region109: #{tpu_custom_call.1} parent=104 // pred_fallthru
          _
      $region105: #{tpu_custom_call.1} parent=5 // pred_fallthru
        _
    $region6: #{tpu_custom_call.1} parent=1 // loop_footer
      %s21 = sadd.s32 1, %s17
    $region7: #{tpu_custom_call.1} parent=1 // loop_footer_branch
      %16 = sbr.rel target = $region3
    $region8: #{tpu_custom_call.1} parent=1 // loop_exit
      _
    %1815 = vsyncpa [#allocation6], 1
    %s1816 = scalar_lea.sflag [#allocation6], 1
    %1817 = vsyncpa %s1816, 1
    %1818 = vsyncpa [#allocation9], 1
    %1819 = vsyncpa [#allocation7], 1
    %s1820 = scalar_lea.sflag [#allocation7], 1
    %1821 = vsyncpa %s1820, 1

</llo_original>
